<compile_context>
chip_gen: v7x
topology: tpu7x:2x2x1
jax: 0.10.0
libtpu: 0.0.40
codegen_flags: <defaults>
</compile_context>

<pallas_src>
import jax
import jax.numpy as jnp
from jax.experimental import pallas as pl
from jax.experimental.pallas import tpu as pltpu


# ----------------------------------------------------------------------------
# Kernel
# ----------------------------------------------------------------------------
def _temporal_rel_attn_kernel(
    src_ref,     # [TB, D]     bf16  source node features
    nbr_ref,     # [TB, N*D]   bf16  neighbor features (key == value), flat slab
    time_ref,    # [TB, N*D]   bf16  neighbor time features, flat slab
    negm_ref,    # [TB, N]     bf16  additive mask (0 valid, -1e9 padded)
    wqt_ref,     # [D, N*D]    bf16  (wq * scale) tiled N times along columns
    wkb_ref,     # [N*D, N*D]  bf16  block-diag(wk)
    wvb_ref,     # [N*D, N*D]  bf16  block-diag(wv)
    wrb_ref,     # [N*D, N*D]  bf16  block-diag(wr)
    selb_ref,    # [N*D, N*D]  bf16  block-diag(per-head 0/1 selector)
    mexp_ref,    # [N, N*D]    bf16  0/1 mask lane-expansion
    coll_ref,    # [N*D, D]    bf16  0/1 neighbor-collapse
    w1af_ref,    # [D, D]      bf16  wo @ w1[:D]   (output proj folded into fc1)
    w1b_ref,     # [D, D]      bf16  w1[D:]
    w2_ref,      # [D, Do]     bf16
    biasw_ref,   # [8, N*D]    f32   rows: bq*s, rbias*s, bk, bv, br (tiled), 0, 0, 0
    biasn_ref,   # [8, D]      f32   rows: bo @ w1[:D], b1, 0...
    b2_ref,      # [1, Do]     f32
    out_ref,     # [TB, Do]    f32
):
    f32 = jnp.float32
    bf16 = jnp.bfloat16
    D = src_ref.shape[1]
    ND = nbr_ref.shape[1]

    bw = biasw_ref[...]                                       # [8, N*D]
    bq_t, rb_t, bk_t, bv_t, br_t = bw[0:1], bw[1:2], bw[2:3], bw[3:4], bw[4:5]
    bn = biasn_ref[...]                                       # [8, D]
    bo_w1a, b1 = bn[0:1], bn[1:2]

    src_bf = src_ref[...]                                     # [TB, D]
    nbr_bf = nbr_ref[...]                                     # [TB, N*D]
    time_bf = time_ref[...]                                   # [TB, N*D]
    negm_bf = negm_ref[...]                                   # [TB, N]

    # --- projections: bf16 operands, f32 accumulation on the MXU -------------
    q_t = jnp.dot(src_bf, wqt_ref[...], preferred_element_type=f32) + bq_t   # [TB, N*D]
    k_t = jnp.dot(nbr_bf, wkb_ref[...], preferred_element_type=f32) + bk_t
    v_t = jnp.dot(nbr_bf, wvb_ref[...], preferred_element_type=f32) + bv_t
    r_t = jnp.dot(time_bf, wrb_ref[...], preferred_element_type=f32) + br_t

    # --- relative-attention scores, replicated across each head's lanes ------
    contrib = k_t * q_t + r_t * (q_t + rb_t)                                  # [TB, N*D]
    scores = jnp.dot(contrib.astype(bf16), selb_ref[...],
                     preferred_element_type=f32)                              # [TB, N*D]
    scores = scores + jnp.dot(negm_bf, mexp_ref[...], preferred_element_type=f32)

    # per-(row, head-lane) max over the N neighbor blocks: cyclic lane butterfly
    m = scores
    shift = D
    while shift < ND:
        m = jnp.maximum(m, pltpu.roll(m, shift, 1))
        shift *= 2
    e = jnp.exp(scores - m)                                                   # [TB, N*D]

    # --- softmax-weighted value sum via 0/1 collapse matmuls -----------------
    num = jnp.dot((e * v_t).astype(bf16), coll_ref[...],
                  preferred_element_type=f32)                                 # [TB, D]
    den = jnp.dot(e.astype(bf16), coll_ref[...], preferred_element_type=f32)  # [TB, D]
    attn = num * pl.reciprocal(den, approx=True)                              # [TB, D]
    # TODO(synk): attention dropout (p=0.1) skipped -> eval-mode identity.

    # --- output projection folded into merger fc1 (attn branch) --------------
    h_attn = jnp.dot(attn.astype(bf16), w1af_ref[...],
                     preferred_element_type=f32) + bo_w1a                     # [TB, D]
    invalid = jnp.max(negm_bf.astype(f32), axis=1, keepdims=True) < -0.5e9    # [TB, 1]
    h_attn = jnp.where(invalid, 0.0, h_attn)

    # --- MergeLayer: fc2(relu(fc1(cat(attn, src)))) with split fc1 weight ----
    h1 = h_attn + jnp.dot(src_bf, w1b_ref[...], preferred_element_type=f32) + b1
    h1 = jnp.maximum(h1, 0.0)
    out_ref[...] = (jnp.dot(h1.astype(bf16), w2_ref[...],
                            preferred_element_type=f32)
                    + b2_ref[...]).astype(out_ref.dtype)


# ----------------------------------------------------------------------------
# Parameter construction / packing
# ----------------------------------------------------------------------------
def init_linear(key, d_in, d_out):
    """Deterministic nn.Linear-style init, weight stored as [in, out]."""
    k1, k2 = jax.random.split(key)
    bound = 1.0 / (d_in ** 0.5)
    w = jax.random.uniform(k1, (d_in, d_out), jnp.float32, -bound, bound)
    b = jax.random.uniform(k2, (1, d_out), jnp.float32, -bound, bound)
    return w, b


def init_params(key, n_node_features, output_dimension, n_head):
    D = n_node_features
    ks = jax.random.split(key, 8)
    p = {}
    p["wq"], p["bq"] = init_linear(ks[0], D, D)
    p["wk"], p["bk"] = init_linear(ks[1], D, D)
    p["wv"], p["bv"] = init_linear(ks[2], D, D)
    p["wr"], p["br"] = init_linear(ks[3], D, D)
    # torch.rand(1, h, 1, d_k), flattened head-major -> [1, D]
    p["rbias"] = jax.random.uniform(ks[4], (1, D), jnp.float32, 0.0, 1.0)
    p["wo"], p["bo"] = init_linear(ks[5], D, D)
    # MergeLayer(query_dim, n_node_features, n_node_features, output_dimension)
    p["w1"], p["b1"] = init_linear(ks[6], 2 * D, D)
    p["w2"], p["b2"] = init_linear(ks[7], D, output_dimension)
    return p


def pack_params(params, n_head, n_neighbors):
    """One-time host-side packing for the lane-dense kernel formulation."""
    D = params["wq"].shape[0]
    N = n_neighbors
    d_k = D // n_head
    scale = 1.0 / (d_k ** 0.5)
    f32, bf16 = jnp.float32, jnp.bfloat16

    eyeN = jnp.eye(N, dtype=f32)
    head = jnp.arange(D) // d_k
    sel = (head[:, None] == head[None, :]).astype(f32)         # [D, D] same-head 0/1

    def blockdiag(w):                                          # [D,D] -> [N*D, N*D]
        return jnp.kron(eyeN, w)

    biasw = jnp.concatenate([
        jnp.tile(params["bq"] * scale, (1, N)),
        jnp.tile(params["rbias"] * scale, (1, N)),
        jnp.tile(params["bk"], (1, N)),
        jnp.tile(params["bv"], (1, N)),
        jnp.tile(params["br"], (1, N)),
        jnp.zeros((3, N * D), f32),
    ], axis=0).astype(f32)                                     # [8, N*D]

    w1a = params["w1"][:D]                                     # attn half of merger fc1
    biasn = jnp.concatenate([
        params["bo"] @ w1a,                                    # bo folded through w1a
        params["b1"],
        jnp.zeros((6, D), f32),
    ], axis=0).astype(f32)                                     # [8, D]

    return {
        "wq_t": jnp.tile(params["wq"] * scale, (1, N)).astype(bf16),        # [D, N*D]
        "wk_b": blockdiag(params["wk"]).astype(bf16),                       # [N*D, N*D]
        "wv_b": blockdiag(params["wv"]).astype(bf16),
        "wr_b": blockdiag(params["wr"]).astype(bf16),
        "sel_b": blockdiag(sel).astype(bf16),
        "mask_exp": jnp.kron(eyeN, jnp.ones((1, D), f32)).astype(bf16),     # [N, N*D]
        "collapse": jnp.tile(jnp.eye(D, dtype=f32), (N, 1)).astype(bf16),   # [N*D, D]
        "w1a_f": (params["wo"] @ w1a).astype(bf16),                         # [D, D]
        "w1b": params["w1"][D:].astype(bf16),                               # [D, D]
        "w2": params["w2"].astype(bf16),                                    # [D, Do]
        "biasw": biasw,
        "biasn": biasn,
        "b2": params["b2"].astype(f32),
    }


# ----------------------------------------------------------------------------
# Wrapper
# ----------------------------------------------------------------------------
def temporal_relative_attention(
    packed,
    src_node_features,        # [B, D]
    src_time_features,        # [B, 1, time_dim]  (unused by the reference forward)
    neighbors_features,       # [B, N, D]
    neighbors_time_features,  # [B, N, time_dim]  (time_dim must equal D)
    edge_features,            # [B, N, E]         (unused by the reference forward)
    neighbors_padding_mask,   # [B, N]            (1.0 == padded)
    *,
    block_b=512,
):
    del src_time_features, edge_features  # not used in this module's forward
    B, N, D = neighbors_features.shape
    assert neighbors_time_features.shape[-1] == D, "r_layer requires time_dim == n_node_features"
    ND = N * D
    out_dim = packed["b2"].shape[-1]

    # Batch tile: large (amortize ~0.35us/step pipeline overhead), multiple of 16
    # (bf16 sublane tile), but capped at ceil(B/2) so the grid keeps >= 2 steps
    # and v7x can shard the "parallel" batch axis across its 2 TensorCores.
    half = max(1, (B + 1) // 2)
    tb_cap = ((half + 15) // 16) * 16
    TB = max(16, min(block_b, tb_cap))
    TB = ((TB + 15) // 16) * 16
    Bp = ((B + TB - 1) // TB) * TB

    bf16 = jnp.bfloat16
    src = src_node_features.astype(bf16)
    nbr = neighbors_features.astype(bf16).reshape(B, ND)      # lane-dense flat slab
    nbt = neighbors_time_features.astype(bf16).reshape(B, ND)
    negm = jnp.where(neighbors_padding_mask > 0.5, -1e9, 0.0).astype(jnp.float32)

    if Bp != B:
        pad = Bp - B
        src = jnp.pad(src, ((0, pad), (0, 0)))
        nbr = jnp.pad(nbr, ((0, pad), (0, 0)))
        nbt = jnp.pad(nbt, ((0, pad), (0, 0)))
        negm = jnp.pad(negm, ((0, pad), (0, 0)), constant_values=-1e9)
    negm = negm.astype(bf16)

    row = lambda i: (i, 0)
    const = lambda i: (0, 0)   # weights / biases stay VMEM-resident (same block every step)

    out = pl.pallas_call(
        _temporal_rel_attn_kernel,
        out_shape=jax.ShapeDtypeStruct((Bp, out_dim), jnp.float32),
        grid_spec=pltpu.PrefetchScalarGridSpec(
            num_scalar_prefetch=0,
            grid=(Bp // TB,),
            in_specs=[
                pl.BlockSpec((TB, D), row),          # src
                pl.BlockSpec((TB, ND), row),         # neighbors (flat, 256-lane dense)
                pl.BlockSpec((TB, ND), row),         # neighbor time features (flat)
                pl.BlockSpec((TB, N), row),          # additive padding mask
                pl.BlockSpec((D, ND), const),        # wq_t (scale folded, tiled)
                pl.BlockSpec((ND, ND), const),       # block-diag wk
                pl.BlockSpec((ND, ND), const),       # block-diag wv
                pl.BlockSpec((ND, ND), const),       # block-diag wr
                pl.BlockSpec((ND, ND), const),       # block-diag head selector
                pl.BlockSpec((N, ND), const),        # mask lane-expansion
                pl.BlockSpec((ND, D), const),        # neighbor collapse
                pl.BlockSpec((D, D), const),         # wo @ w1a (folded)
                pl.BlockSpec((D, D), const),         # w1b
                pl.BlockSpec((D, out_dim), const),   # w2
                pl.BlockSpec((8, ND), const),        # packed wide biases
                pl.BlockSpec((8, D), const),         # packed narrow biases
                pl.BlockSpec((1, out_dim), const),   # b2
            ],
            out_specs=pl.BlockSpec((TB, out_dim), row),
        ),
        compiler_params=pltpu.CompilerParams(
            dimension_semantics=("parallel",),          # shard batch grid across TCs (v7x)
            vmem_limit_bytes=48 * 1024 * 1024,          # <= v7x's 64 MiB physical VMEM
        ),
    )(src, nbr, nbt, negm,
      packed["wq_t"], packed["wk_b"], packed["wv_b"], packed["wr_b"],
      packed["sel_b"], packed["mask_exp"], packed["collapse"],
      packed["w1a_f"], packed["w1b"], packed["w2"],
      packed["biasw"], packed["biasn"], packed["b2"])

    # attn_output_weights is None in the reference forward
    return out[:B], None


# ----------------------------------------------------------------------------
# Pure-JAX reference (f32) mirroring the torch module, for a sanity check.
# ----------------------------------------------------------------------------
def reference_forward(params, src, nbr, nbr_t, mask, n_head):
    B, N, D = nbr.shape
    d_k = D // n_head
    scale = 1.0 / d_k ** 0.5
    q = src @ params["wq"] + params["bq"]
    k = nbr.reshape(B * N, D) @ params["wk"] + params["bk"]
    v = nbr.reshape(B * N, D) @ params["wv"] + params["bv"]
    r = nbr_t.reshape(B * N, D) @ params["wr"] + params["br"]
    qh = q.reshape(B, n_head, d_k)
    kh = k.reshape(B, N, n_head, d_k)
    vh = v.reshape(B, N, n_head, d_k)
    rh = r.reshape(B, N, n_head, d_k)
    rb = params["rbias"].reshape(1, n_head, d_k)
    scores = (jnp.einsum("bhd,bnhd->bhn", qh, kh)
              + jnp.einsum("bhd,bnhd->bhn", qh + rb, rh)) * scale
    pad = mask[:, None, :] > 0.5
    scores = jnp.where(pad, -1e9, scores)
    p = jax.nn.softmax(scores, axis=-1)
    o = jnp.einsum("bhn,bnhd->bhd", p, vh).reshape(B, D)
    o = o @ params["wo"] + params["bo"]
    invalid = jnp.all(mask > 0.5, axis=1, keepdims=True)
    o = jnp.where(invalid, 0.0, o)
    cat = jnp.concatenate([o, src], axis=-1)
    h1 = jnp.maximum(cat @ params["w1"] + params["b1"], 0.0)
    return h1 @ params["w2"] + params["b2"]


if __name__ == "__main__":
    B, N = 32, 8
    n_node_features = 32      # == time_dim (required by r_layer)
    time_dim = 32
    n_edge_features = 8
    output_dimension = 32
    n_head = 2

    key = jax.random.PRNGKey(0)
    k_par, k_src, k_nb, k_t, k_e, k_m, k_st = jax.random.split(key, 7)

    params = init_params(k_par, n_node_features, output_dimension, n_head)
    packed = pack_params(params, n_head, N)

    src_node_features = jax.random.normal(k_src, (B, n_node_features), jnp.float32)
    src_time_features = jax.random.normal(k_st, (B, 1, time_dim), jnp.float32)
    neighbors_features = jax.random.normal(k_nb, (B, N, n_node_features), jnp.float32)
    neighbors_time_features = jax.random.normal(k_t, (B, N, time_dim), jnp.float32)
    edge_features = jax.random.normal(k_e, (B, N, n_edge_features), jnp.float32)
    neighbors_padding_mask = (jax.random.uniform(k_m, (B, N)) < 0.3).astype(jnp.float32)
    # make one batch row fully padded to exercise the invalid-neighborhood path
    neighbors_padding_mask = neighbors_padding_mask.at[0].set(1.0)

    out, attn_w = temporal_relative_attention(
        packed,
        src_node_features,
        src_time_features,
        neighbors_features,
        neighbors_time_features,
        edge_features,
        neighbors_padding_mask,
    )
    out = jax.block_until_ready(out)
    assert out.shape == (B, output_dimension)

    # loose tolerance: kernel uses bf16 MXU operands with f32 accumulation
    ref = reference_forward(params, src_node_features, neighbors_features,
                            neighbors_time_features, neighbors_padding_mask, n_head)
    max_err = float(jnp.max(jnp.abs(out - ref)))
    assert max_err < 0.2, f"max abs error vs reference: {max_err}"
    print("KERNEL_OK")
</pallas_src>

<mosaic_0001>
module attributes {stable_mosaic.version = 11 : i64} {
  func.func @_temporal_rel_attn_kernel(%arg0: i32, %arg1: memref<16x32xbf16, #tpu.memory_space<vmem>>, %arg2: memref<16x256xbf16, #tpu.memory_space<vmem>>, %arg3: memref<16x256xbf16, #tpu.memory_space<vmem>>, %arg4: memref<16x8xbf16, #tpu.memory_space<vmem>>, %arg5: memref<32x256xbf16, #tpu.memory_space<vmem>>, %arg6: memref<256x256xbf16, #tpu.memory_space<vmem>>, %arg7: memref<256x256xbf16, #tpu.memory_space<vmem>>, %arg8: memref<256x256xbf16, #tpu.memory_space<vmem>>, %arg9: memref<256x256xbf16, #tpu.memory_space<vmem>>, %arg10: memref<8x256xbf16, #tpu.memory_space<vmem>>, %arg11: memref<256x32xbf16, #tpu.memory_space<vmem>>, %arg12: memref<32x32xbf16, #tpu.memory_space<vmem>>, %arg13: memref<32x32xbf16, #tpu.memory_space<vmem>>, %arg14: memref<32x32xbf16, #tpu.memory_space<vmem>>, %arg15: memref<8x256xf32, #tpu.memory_space<vmem>>, %arg16: memref<8x32xf32, #tpu.memory_space<vmem>>, %arg17: memref<1x32xf32, #tpu.memory_space<vmem>>, %arg18: memref<16x32xf32, #tpu.memory_space<vmem>>) attributes {dimension_semantics = [#tpu.dimension_semantics<parallel>], iteration_bounds = array<i64: 2>, scalar_prefetch = 0 : i64, scratch_operands = 0 : i64, tpu.core_type = #tpu.core_type<tc>, window_params = [{transform_indices = @transform_0, window_bounds = array<i64: 16, 32>}, {transform_indices = @transform_1, window_bounds = array<i64: 16, 256>}, {transform_indices = @transform_2, window_bounds = array<i64: 16, 256>}, {transform_indices = @transform_3, window_bounds = array<i64: 16, 8>}, {pipeline_mode = #tpu.pipeline_mode<synchronous>, transform_indices = @transform_4, window_bounds = array<i64: 32, 256>}, {pipeline_mode = #tpu.pipeline_mode<synchronous>, transform_indices = @transform_5, window_bounds = array<i64: 256, 256>}, {pipeline_mode = #tpu.pipeline_mode<synchronous>, transform_indices = @transform_6, window_bounds = array<i64: 256, 256>}, {pipeline_mode = #tpu.pipeline_mode<synchronous>, transform_indices = @transform_7, window_bounds = array<i64: 256, 256>}, {pipeline_mode = #tpu.pipeline_mode<synchronous>, transform_indices = @transform_8, window_bounds = array<i64: 256, 256>}, {pipeline_mode = #tpu.pipeline_mode<synchronous>, transform_indices = @transform_9, window_bounds = array<i64: 8, 256>}, {pipeline_mode = #tpu.pipeline_mode<synchronous>, transform_indices = @transform_10, window_bounds = array<i64: 256, 32>}, {pipeline_mode = #tpu.pipeline_mode<synchronous>, transform_indices = @transform_11, window_bounds = array<i64: 32, 32>}, {pipeline_mode = #tpu.pipeline_mode<synchronous>, transform_indices = @transform_12, window_bounds = array<i64: 32, 32>}, {pipeline_mode = #tpu.pipeline_mode<synchronous>, transform_indices = @transform_13, window_bounds = array<i64: 32, 32>}, {pipeline_mode = #tpu.pipeline_mode<synchronous>, transform_indices = @transform_14, window_bounds = array<i64: 8, 256>}, {pipeline_mode = #tpu.pipeline_mode<synchronous>, transform_indices = @transform_15, window_bounds = array<i64: 8, 32>}, {pipeline_mode = #tpu.pipeline_mode<synchronous>, transform_indices = @transform_16, window_bounds = array<i64: 1, 32>}, {transform_indices = @transform_17, window_bounds = array<i64: 16, 32>}]} {
    %c0 = arith.constant 0 : index
    %c0_0 = arith.constant 0 : index
    %0 = vector.load %arg15[%c0, %c0_0] : memref<8x256xf32, #tpu.memory_space<vmem>>, vector<8x256xf32>
    %1 = vector.extract_strided_slice %0 {offsets = [0, 0], sizes = [1, 256], strides = [1, 1]} : vector<8x256xf32> to vector<1x256xf32>
    %2 = vector.extract_strided_slice %0 {offsets = [1, 0], sizes = [1, 256], strides = [1, 1]} : vector<8x256xf32> to vector<1x256xf32>
    %3 = vector.extract_strided_slice %0 {offsets = [2, 0], sizes = [1, 256], strides = [1, 1]} : vector<8x256xf32> to vector<1x256xf32>
    %4 = vector.extract_strided_slice %0 {offsets = [3, 0], sizes = [1, 256], strides = [1, 1]} : vector<8x256xf32> to vector<1x256xf32>
    %5 = vector.extract_strided_slice %0 {offsets = [4, 0], sizes = [1, 256], strides = [1, 1]} : vector<8x256xf32> to vector<1x256xf32>
    %c0_1 = arith.constant 0 : index
    %c0_2 = arith.constant 0 : index
    %6 = vector.load %arg16[%c0_1, %c0_2] : memref<8x32xf32, #tpu.memory_space<vmem>>, vector<8x32xf32>
    %7 = vector.extract_strided_slice %6 {offsets = [0, 0], sizes = [1, 32], strides = [1, 1]} : vector<8x32xf32> to vector<1x32xf32>
    %8 = vector.extract_strided_slice %6 {offsets = [1, 0], sizes = [1, 32], strides = [1, 1]} : vector<8x32xf32> to vector<1x32xf32>
    %c0_3 = arith.constant 0 : index
    %c0_4 = arith.constant 0 : index
    %9 = vector.load %arg1[%c0_3, %c0_4] : memref<16x32xbf16, #tpu.memory_space<vmem>>, vector<16x32xbf16>
    %c0_5 = arith.constant 0 : index
    %c0_6 = arith.constant 0 : index
    %10 = vector.load %arg2[%c0_5, %c0_6] : memref<16x256xbf16, #tpu.memory_space<vmem>>, vector<16x256xbf16>
    %c0_7 = arith.constant 0 : index
    %c0_8 = arith.constant 0 : index
    %11 = vector.load %arg3[%c0_7, %c0_8] : memref<16x256xbf16, #tpu.memory_space<vmem>>, vector<16x256xbf16>
    %c0_9 = arith.constant 0 : index
    %c0_10 = arith.constant 0 : index
    %12 = vector.load %arg4[%c0_9, %c0_10] : memref<16x8xbf16, #tpu.memory_space<vmem>>, vector<16x8xbf16>
    %c0_11 = arith.constant 0 : index
    %c0_12 = arith.constant 0 : index
    %13 = vector.load %arg5[%c0_11, %c0_12] : memref<32x256xbf16, #tpu.memory_space<vmem>>, vector<32x256xbf16>
    %cst = arith.constant dense<0.000000e+00> : vector<16x256xf32>
    %14 = tpu.matmul %9, %13, %cst {dimension_numbers = #tpu.dot_dimension_numbers<[1], [0], [0], [1], [0, 0, 1, 1], [], []>} : vector<16x32xbf16>, vector<32x256xbf16>, vector<16x256xf32> -> vector<16x256xf32>
    %15 = vector.broadcast %1 : vector<1x256xf32> to vector<16x256xf32>
    %16 = arith.addf %14, %15 : vector<16x256xf32>
    %c0_13 = arith.constant 0 : index
    %c0_14 = arith.constant 0 : index
    %17 = vector.load %arg6[%c0_13, %c0_14] : memref<256x256xbf16, #tpu.memory_space<vmem>>, vector<256x256xbf16>
    %cst_15 = arith.constant dense<0.000000e+00> : vector<16x256xf32>
    %18 = tpu.matmul %10, %17, %cst_15 {dimension_numbers = #tpu.dot_dimension_numbers<[1], [0], [0], [1], [0, 0, 1, 1], [], []>} : vector<16x256xbf16>, vector<256x256xbf16>, vector<16x256xf32> -> vector<16x256xf32>
    %19 = vector.broadcast %3 : vector<1x256xf32> to vector<16x256xf32>
    %20 = arith.addf %18, %19 : vector<16x256xf32>
    %c0_16 = arith.constant 0 : index
    %c0_17 = arith.constant 0 : index
    %21 = vector.load %arg7[%c0_16, %c0_17] : memref<256x256xbf16, #tpu.memory_space<vmem>>, vector<256x256xbf16>
    %cst_18 = arith.constant dense<0.000000e+00> : vector<16x256xf32>
    %22 = tpu.matmul %10, %21, %cst_18 {dimension_numbers = #tpu.dot_dimension_numbers<[1], [0], [0], [1], [0, 0, 1, 1], [], []>} : vector<16x256xbf16>, vector<256x256xbf16>, vector<16x256xf32> -> vector<16x256xf32>
    %23 = vector.broadcast %4 : vector<1x256xf32> to vector<16x256xf32>
    %24 = arith.addf %22, %23 : vector<16x256xf32>
    %c0_19 = arith.constant 0 : index
    %c0_20 = arith.constant 0 : index
    %25 = vector.load %arg8[%c0_19, %c0_20] : memref<256x256xbf16, #tpu.memory_space<vmem>>, vector<256x256xbf16>
    %cst_21 = arith.constant dense<0.000000e+00> : vector<16x256xf32>
    %26 = tpu.matmul %11, %25, %cst_21 {dimension_numbers = #tpu.dot_dimension_numbers<[1], [0], [0], [1], [0, 0, 1, 1], [], []>} : vector<16x256xbf16>, vector<256x256xbf16>, vector<16x256xf32> -> vector<16x256xf32>
    %27 = vector.broadcast %5 : vector<1x256xf32> to vector<16x256xf32>
    %28 = arith.addf %26, %27 : vector<16x256xf32>
    %29 = arith.mulf %20, %16 : vector<16x256xf32>
    %30 = vector.broadcast %2 : vector<1x256xf32> to vector<16x256xf32>
    %31 = arith.addf %16, %30 : vector<16x256xf32>
    %32 = arith.mulf %28, %31 : vector<16x256xf32>
    %33 = arith.addf %29, %32 : vector<16x256xf32>
    %34 = arith.truncf %33 : vector<16x256xf32> to vector<16x256xbf16>
    %c0_22 = arith.constant 0 : index
    %c0_23 = arith.constant 0 : index
    %35 = vector.load %arg9[%c0_22, %c0_23] : memref<256x256xbf16, #tpu.memory_space<vmem>>, vector<256x256xbf16>
    %cst_24 = arith.constant dense<0.000000e+00> : vector<16x256xf32>
    %36 = tpu.matmul %34, %35, %cst_24 {dimension_numbers = #tpu.dot_dimension_numbers<[1], [0], [0], [1], [0, 0, 1, 1], [], []>} : vector<16x256xbf16>, vector<256x256xbf16>, vector<16x256xf32> -> vector<16x256xf32>
    %c0_25 = arith.constant 0 : index
    %c0_26 = arith.constant 0 : index
    %37 = vector.load %arg10[%c0_25, %c0_26] : memref<8x256xbf16, #tpu.memory_space<vmem>>, vector<8x256xbf16>
    %cst_27 = arith.constant dense<0.000000e+00> : vector<16x256xf32>
    %38 = tpu.matmul %12, %37, %cst_27 {dimension_numbers = #tpu.dot_dimension_numbers<[1], [0], [0], [1], [0, 0, 1, 1], [], []>} : vector<16x8xbf16>, vector<8x256xbf16>, vector<16x256xf32> -> vector<16x256xf32>
    %39 = arith.addf %36, %38 : vector<16x256xf32>
    %c32_i32 = arith.constant 32 : i32
    %40 = tpu.dynamic_rotate %39 by %c32_i32 dim 1 : vector<16x256xf32>, i32 -> vector<16x256xf32>
    %41 = arith.maximumf %39, %40 : vector<16x256xf32>
    %c64_i32 = arith.constant 64 : i32
    %42 = tpu.dynamic_rotate %41 by %c64_i32 dim 1 : vector<16x256xf32>, i32 -> vector<16x256xf32>
    %43 = arith.maximumf %41, %42 : vector<16x256xf32>
    %c128_i32 = arith.constant 128 : i32
    %44 = tpu.dynamic_rotate %43 by %c128_i32 dim 1 : vector<16x256xf32>, i32 -> vector<16x256xf32>
    %45 = arith.maximumf %43, %44 : vector<16x256xf32>
    %46 = arith.subf %39, %45 : vector<16x256xf32>
    %47 = math.exp %46 : vector<16x256xf32>
    %48 = arith.mulf %47, %24 : vector<16x256xf32>
    %49 = arith.truncf %48 : vector<16x256xf32> to vector<16x256xbf16>
    %c0_28 = arith.constant 0 : index
    %c0_29 = arith.constant 0 : index
    %50 = vector.load %arg11[%c0_28, %c0_29] : memref<256x32xbf16, #tpu.memory_space<vmem>>, vector<256x32xbf16>
    %cst_30 = arith.constant dense<0.000000e+00> : vector<16x32xf32>
    %51 = tpu.matmul %49, %50, %cst_30 {dimension_numbers = #tpu.dot_dimension_numbers<[1], [0], [0], [1], [0, 0, 1, 1], [], []>} : vector<16x256xbf16>, vector<256x32xbf16>, vector<16x32xf32> -> vector<16x32xf32>
    %52 = arith.truncf %47 : vector<16x256xf32> to vector<16x256xbf16>
    %c0_31 = arith.constant 0 : index
    %c0_32 = arith.constant 0 : index
    %53 = vector.load %arg11[%c0_31, %c0_32] : memref<256x32xbf16, #tpu.memory_space<vmem>>, vector<256x32xbf16>
    %cst_33 = arith.constant dense<0.000000e+00> : vector<16x32xf32>
    %54 = tpu.matmul %52, %53, %cst_33 {dimension_numbers = #tpu.dot_dimension_numbers<[1], [0], [0], [1], [0, 0, 1, 1], [], []>} : vector<16x256xbf16>, vector<256x32xbf16>, vector<16x32xf32> -> vector<16x32xf32>
    %55 = tpu.reciprocal %54 {approx = true} : vector<16x32xf32> -> vector<16x32xf32>
    %56 = arith.mulf %51, %55 : vector<16x32xf32>
    %57 = arith.truncf %56 : vector<16x32xf32> to vector<16x32xbf16>
    %c0_34 = arith.constant 0 : index
    %c0_35 = arith.constant 0 : index
    %58 = vector.load %arg12[%c0_34, %c0_35] : memref<32x32xbf16, #tpu.memory_space<vmem>>, vector<32x32xbf16>
    %cst_36 = arith.constant dense<0.000000e+00> : vector<16x32xf32>
    %59 = tpu.matmul %57, %58, %cst_36 {dimension_numbers = #tpu.dot_dimension_numbers<[1], [0], [0], [1], [0, 0, 1, 1], [], []>} : vector<16x32xbf16>, vector<32x32xbf16>, vector<16x32xf32> -> vector<16x32xf32>
    %60 = vector.broadcast %7 : vector<1x32xf32> to vector<16x32xf32>
    %61 = arith.addf %59, %60 : vector<16x32xf32>
    %62 = arith.extf %12 : vector<16x8xbf16> to vector<16x8xf32>
    %cst_37 = arith.constant dense<0xFF800000> : vector<16xf32>
    %63 = vector.multi_reduction <maximumf>, %62, %cst_37 [1] : vector<16x8xf32> to vector<16xf32>
    %64 = vector.shape_cast %63 : vector<16xf32> to vector<16x1xf32>
    %cst_38 = arith.constant -5.000000e+08 : f32
    %65 = vector.broadcast %cst_38 : f32 to vector<16x1xf32>
    %66 = arith.cmpf olt, %64, %65 : vector<16x1xf32>
    %cst_39 = arith.constant 0.000000e+00 : f32
    %67 = vector.shape_cast %66 : vector<16x1xi1> to vector<16x1xi1>
    %68 = vector.broadcast %67 : vector<16x1xi1> to vector<16x32xi1>
    %69 = vector.broadcast %cst_39 : f32 to vector<16x32xf32>
    %70 = arith.select %68, %69, %61 : vector<16x32xi1>, vector<16x32xf32>
    %c0_40 = arith.constant 0 : index
    %c0_41 = arith.constant 0 : index
    %71 = vector.load %arg13[%c0_40, %c0_41] : memref<32x32xbf16, #tpu.memory_space<vmem>>, vector<32x32xbf16>
    %cst_42 = arith.constant dense<0.000000e+00> : vector<16x32xf32>
    %72 = tpu.matmul %9, %71, %cst_42 {dimension_numbers = #tpu.dot_dimension_numbers<[1], [0], [0], [1], [0, 0, 1, 1], [], []>} : vector<16x32xbf16>, vector<32x32xbf16>, vector<16x32xf32> -> vector<16x32xf32>
    %73 = arith.addf %70, %72 : vector<16x32xf32>
    %74 = vector.broadcast %8 : vector<1x32xf32> to vector<16x32xf32>
    %75 = arith.addf %73, %74 : vector<16x32xf32>
    %cst_43 = arith.constant 0.000000e+00 : f32
    %76 = vector.broadcast %cst_43 : f32 to vector<16x32xf32>
    %77 = arith.maximumf %75, %76 : vector<16x32xf32>
    %78 = arith.truncf %77 : vector<16x32xf32> to vector<16x32xbf16>
    %c0_44 = arith.constant 0 : index
    %c0_45 = arith.constant 0 : index
    %79 = vector.load %arg14[%c0_44, %c0_45] : memref<32x32xbf16, #tpu.memory_space<vmem>>, vector<32x32xbf16>
    %cst_46 = arith.constant dense<0.000000e+00> : vector<16x32xf32>
    %80 = tpu.matmul %78, %79, %cst_46 {dimension_numbers = #tpu.dot_dimension_numbers<[1], [0], [0], [1], [0, 0, 1, 1], [], []>} : vector<16x32xbf16>, vector<32x32xbf16>, vector<16x32xf32> -> vector<16x32xf32>
    %c0_47 = arith.constant 0 : index
    %c0_48 = arith.constant 0 : index
    %81 = vector.load %arg17[%c0_47, %c0_48] : memref<1x32xf32, #tpu.memory_space<vmem>>, vector<1x32xf32>
    %82 = vector.broadcast %81 : vector<1x32xf32> to vector<16x32xf32>
    %83 = arith.addf %80, %82 : vector<16x32xf32>
    %c0_49 = arith.constant 0 : index
    %c0_50 = arith.constant 0 : index
    %84 = vector.load %arg18[%c0_49, %c0_50] : memref<16x32xf32, #tpu.memory_space<vmem>>, vector<16x32xf32>
    tpu.vector_store %arg18[%c0_49, %c0_50], %83 {strides = array<i32>} : memref<16x32xf32, #tpu.memory_space<vmem>>, vector<16x32xf32>,
    return
  }
  func.func @transform_0(%arg0: i32) -> (i32, i32) {
    %c0_i32 = arith.constant 0 : i32
    %c0_i32_0 = arith.constant 0 : i32
    return %arg0, %c0_i32 : i32, i32
  }
  func.func @transform_1(%arg0: i32) -> (i32, i32) {
    %c0_i32 = arith.constant 0 : i32
    %c0_i32_0 = arith.constant 0 : i32
    return %arg0, %c0_i32 : i32, i32
  }
  func.func @transform_2(%arg0: i32) -> (i32, i32) {
    %c0_i32 = arith.constant 0 : i32
    %c0_i32_0 = arith.constant 0 : i32
    return %arg0, %c0_i32 : i32, i32
  }
  func.func @transform_3(%arg0: i32) -> (i32, i32) {
    %c0_i32 = arith.constant 0 : i32
    %c0_i32_0 = arith.constant 0 : i32
    return %arg0, %c0_i32 : i32, i32
  }
  func.func @transform_4(%arg0: i32) -> (i32, i32) {
    %c0_i32 = arith.constant 0 : i32
    %c0_i32_0 = arith.constant 0 : i32
    %c0_i32_1 = arith.constant 0 : i32
    return %c0_i32, %c0_i32_0 : i32, i32
  }
  func.func @transform_5(%arg0: i32) -> (i32, i32) {
    %c0_i32 = arith.constant 0 : i32
    %c0_i32_0 = arith.constant 0 : i32
    %c0_i32_1 = arith.constant 0 : i32
    return %c0_i32, %c0_i32_0 : i32, i32
  }
  func.func @transform_6(%arg0: i32) -> (i32, i32) {
    %c0_i32 = arith.constant 0 : i32
    %c0_i32_0 = arith.constant 0 : i32
    %c0_i32_1 = arith.constant 0 : i32
    return %c0_i32, %c0_i32_0 : i32, i32
  }
  func.func @transform_7(%arg0: i32) -> (i32, i32) {
    %c0_i32 = arith.constant 0 : i32
    %c0_i32_0 = arith.constant 0 : i32
    %c0_i32_1 = arith.constant 0 : i32
    return %c0_i32, %c0_i32_0 : i32, i32
  }
  func.func @transform_8(%arg0: i32) -> (i32, i32) {
    %c0_i32 = arith.constant 0 : i32
    %c0_i32_0 = arith.constant 0 : i32
    %c0_i32_1 = arith.constant 0 : i32
    return %c0_i32, %c0_i32_0 : i32, i32
  }
  func.func @transform_9(%arg0: i32) -> (i32, i32) {
    %c0_i32 = arith.constant 0 : i32
    %c0_i32_0 = arith.constant 0 : i32
    %c0_i32_1 = arith.constant 0 : i32
    return %c0_i32, %c0_i32_0 : i32, i32
  }
  func.func @transform_10(%arg0: i32) -> (i32, i32) {
    %c0_i32 = arith.constant 0 : i32
    %c0_i32_0 = arith.constant 0 : i32
    %c0_i32_1 = arith.constant 0 : i32
    return %c0_i32, %c0_i32_0 : i32, i32
  }
  func.func @transform_11(%arg0: i32) -> (i32, i32) {
    %c0_i32 = arith.constant 0 : i32
    %c0_i32_0 = arith.constant 0 : i32
    %c0_i32_1 = arith.constant 0 : i32
    return %c0_i32, %c0_i32_0 : i32, i32
  }
  func.func @transform_12(%arg0: i32) -> (i32, i32) {
    %c0_i32 = arith.constant 0 : i32
    %c0_i32_0 = arith.constant 0 : i32
    %c0_i32_1 = arith.constant 0 : i32
    return %c0_i32, %c0_i32_0 : i32, i32
  }
  func.func @transform_13(%arg0: i32) -> (i32, i32) {
    %c0_i32 = arith.constant 0 : i32
    %c0_i32_0 = arith.constant 0 : i32
    %c0_i32_1 = arith.constant 0 : i32
    return %c0_i32, %c0_i32_0 : i32, i32
  }
  func.func @transform_14(%arg0: i32) -> (i32, i32) {
    %c0_i32 = arith.constant 0 : i32
    %c0_i32_0 = arith.constant 0 : i32
    %c0_i32_1 = arith.constant 0 : i32
    return %c0_i32, %c0_i32_0 : i32, i32
  }
  func.func @transform_15(%arg0: i32) -> (i32, i32) {
    %c0_i32 = arith.constant 0 : i32
    %c0_i32_0 = arith.constant 0 : i32
    %c0_i32_1 = arith.constant 0 : i32
    return %c0_i32, %c0_i32_0 : i32, i32
  }
  func.func @transform_16(%arg0: i32) -> (i32, i32) {
    %c0_i32 = arith.constant 0 : i32
    %c0_i32_0 = arith.constant 0 : i32
    %c0_i32_1 = arith.constant 0 : i32
    return %c0_i32, %c0_i32_0 : i32, i32
  }
  func.func @transform_17(%arg0: i32) -> (i32, i32) {
    %c0_i32 = arith.constant 0 : i32
    %c0_i32_0 = arith.constant 0 : i32
    return %arg0, %c0_i32 : i32, i32
  }
}

</mosaic_0001>

<llo_original>
// kernel: tpu_custom_call.1
$region0: #{tpu_custom_call.1}
  #allocation0 [shape = 'u32[]', space=smem, size = 0x4, offset = 0x4, fixed_abs, tag = 'smem constant byte address 0x4 - core index']
  #allocation1 [shape = 'u32[144,128]{1,0:T(1,128)}', space=vmem, size = 0x12000, scoped, tag = 'internal scratch']
  %s0 = inlined_call_operand.vmem [shape: bf16[32,32], index: 0, kind: input, shape index: {}]
  %s1 = inlined_call_operand.vmem [shape: bf16[32,256], index: 1, kind: input, shape index: {}]
  %s2 = inlined_call_operand.vmem [shape: bf16[32,256], index: 2, kind: input, shape index: {}]
  %s3 = inlined_call_operand.vmem [shape: bf16[32,8], index: 3, kind: input, shape index: {}]
  %s4 = inlined_call_operand.vmem [shape: bf16[32,256], index: 4, kind: input, shape index: {}]
  %s5 = inlined_call_operand.hbm [shape: bf16[256,256], index: 5, kind: input, shape index: {}]
  %s6 = inlined_call_operand.hbm [shape: bf16[256,256], index: 6, kind: input, shape index: {}]
  %s7 = inlined_call_operand.hbm [shape: bf16[256,256], index: 7, kind: input, shape index: {}]
  %s8 = inlined_call_operand.hbm [shape: bf16[256,256], index: 8, kind: input, shape index: {}]
  %s9 = inlined_call_operand.vmem [shape: bf16[8,256], index: 9, kind: input, shape index: {}]
  %s10 = inlined_call_operand.vmem [shape: bf16[256,32], index: 10, kind: input, shape index: {}]
  %s11 = inlined_call_operand.vmem [shape: bf16[32,32], index: 11, kind: input, shape index: {}]
  %s12 = inlined_call_operand.vmem [shape: bf16[32,32], index: 12, kind: input, shape index: {}]
  %s13 = inlined_call_operand.vmem [shape: bf16[32,32], index: 13, kind: input, shape index: {}]
  %s14 = inlined_call_operand.vmem [shape: f32[8,256], index: 14, kind: input, shape index: {}]
  %s15 = inlined_call_operand.vmem [shape: f32[8,32], index: 15, kind: input, shape index: {}]
  %s16 = inlined_call_operand.vmem [shape: f32[1,32], index: 16, kind: input, shape index: {}]
  %s17 = inlined_call_operand.hbm [shape: f32[32,32], index: 17, kind: output, shape index: {}]
  %s18 = sld [smem:[#allocation0]]
  $region117: #{tpu_custom_call.1} parent=0
    _
  %s20 = ssub.s32 1, %s18
  %s21 = scalar_select 0, %s20, %s18
  $region1: #{tpu_custom_call.1} parent=0
    #allocation2 [shape = 'u8[131072]{0}', space=vmem, size = 0x20000, scoped, tag = 'input window, operand 5, single buffered']
    #allocation3 [shape = 's32[2]{0}', space=sflag, size = 0x8, scoped, tag = 'scoped memory for tpu_custom_call.1']
    #allocation4 [shape = 's32[2]{0}', space=sflag, size = 0x8, scoped, tag = 'scoped memory for tpu_custom_call.1']
    #allocation5 [shape = 'u8[131072]{0}', space=vmem, size = 0x20000, scoped, tag = 'input window, operand 6, single buffered']
    #allocation6 [shape = 's32[1]{0}', space=sflag, size = 0x4, scoped, tag = 'scoped memory for tpu_custom_call.1']
    #allocation7 [shape = 'u8[131072]{0}', space=vmem, size = 0x20000, scoped, tag = 'input window, operand 7, single buffered']
    #allocation8 [shape = 'u8[131072]{0}', space=vmem, size = 0x20000, scoped, tag = 'input window, operand 8, single buffered']
    #allocation9 [shape = 's32[1]{0}', space=sflag, size = 0x4, scoped, tag = 'scoped memory for tpu_custom_call.1']
    #allocation10 [shape = 'u8[16384]{0}', space=vmem, size = 0x4000, scoped, tag = 'output window, operand 0']
    %22 = vsyncpa [#allocation3], 0
    %23 = vsyncpa [#allocation6], 0
    %24 = vsyncpa [#allocation9], 0
    %25 = vsyncpa [#allocation4], 0
    %s26 = scalar_lea.sflag [#allocation4], 1
    %27 = vsyncpa %s26, 0
    loop: start=0, step=1, limit=4
    $region2: #{tpu_custom_call.1} parent=1 // loop_pre_header
      _
    $region3: #{tpu_custom_call.1} parent=1 // loop_header
      %s29 = sphi 0, %s33
      %p30 = scmp.ge.s32.totalorder %s29, 4
      %s39 = sphi 0, %s41
      %s42 = sphi 0, %s39
      %s43 = sphi 0, %s42
      %s59 = sphi 0, %s43
      %s65 = sphi 0, %s67
      %s68 = sphi 0, %s65
      %s69 = sphi 0, %s68
      %s85 = sphi 0, %s69
      %s91 = sphi 0, %s93
      %s94 = sphi 0, %s91
      %s95 = sphi 0, %s94
      %s111 = sphi 0, %s95
      %s117 = sphi 0, %s119
      %s120 = sphi 0, %s117
      %s121 = sphi 0, %s120
      %s137 = sphi 0, %s121
      %s141 = sphi 0, %s141
      %s143 = sphi 0, %s141
      %s144 = sphi 0, %s143
      %s158 = sphi 0, %s144
      %s162 = sphi 0, %s162
      %s164 = sphi 0, %s162
      %s165 = sphi 0, %s164
      %s179 = sphi 0, %s165
      %s183 = sphi 0, %s183
      %s185 = sphi 0, %s183
      %s186 = sphi 0, %s185
      %s200 = sphi 0, %s186
      %s204 = sphi 0, %s204
      %s206 = sphi 0, %s204
      %s207 = sphi 0, %s206
      %s221 = sphi 0, %s207
      %s225 = sphi 0, %s225
      %s227 = sphi 0, %s225
      %s228 = sphi 0, %s227
      %s242 = sphi 0, %s228
      %s246 = sphi 0, %s246
      %s248 = sphi 0, %s246
      %s249 = sphi 0, %s248
      %s263 = sphi 0, %s249
      %s267 = sphi 0, %s267
      %s269 = sphi 0, %s267
      %s270 = sphi 0, %s269
      %s284 = sphi 0, %s270
      %s288 = sphi 0, %s288
      %s290 = sphi 0, %s288
      %s291 = sphi 0, %s290
      %s305 = sphi 0, %s291
      %s309 = sphi 0, %s309
      %s311 = sphi 0, %s309
      %s312 = sphi 0, %s311
      %s326 = sphi 0, %s312
      %s330 = sphi 0, %s330
      %s332 = sphi 0, %s330
      %s333 = sphi 0, %s332
      %s347 = sphi 0, %s333
      %s351 = sphi 0, %s351
      %s353 = sphi 0, %s351
      %s354 = sphi 0, %s353
      %s368 = sphi 0, %s354
      %s372 = sphi 0, %s372
      %s374 = sphi 0, %s372
      %s375 = sphi 0, %s374
      %s389 = sphi 0, %s375
      %s393 = sphi 0, %s393
      %s395 = sphi 0, %s393
      %s396 = sphi 0, %s395
      %s410 = sphi 0, %s396
      %s416 = sphi 0, %s418
      %s419 = sphi 0, %s416
      %s420 = sphi 0, %s419
      %s436 = sphi 0, %s420
    $region4: #{tpu_custom_call.1} parent=1 // loop_header_branch
      %32 = sbr.rel (%p30) target = $region8
    $region5: #{tpu_custom_call.1} parent=1 // loop_body
      %s34 = ssub.s32 %s29, 1
      %s35 = ssub.s32 %s29, 2
      %s36 = sadd.s32 %s29, 1
      %s37 = ssub.s32 %s29, %s36
      %p38 = scmp.eq.s32.totalorder %s37, 0
      %s40 = sadd.s32 %s39, 1
      %s41 = scalar_select %p38, %s39, %s40
      %p44 = pneg %p38
      %p45 = scmp.eq.s32.totalorder %s29, 1
      %p46 = por %p44, %p45
      %p47 = scmp.ne.s32.totalorder %s39, %s42
      %p48 = scmp.eq.s32.totalorder %s29, 0
      %p49 = por %p47, %p48
      %p50 = scmp.ne.s32.totalorder %s39, %s42
      %p51 = scmp.eq.s32.totalorder %s34, 1
      %p52 = por %p50, %p51
      %p53 = scmp.ne.s32.totalorder %s42, %s43
      %p54 = scmp.eq.s32.totalorder %s34, 0
      %p55 = por %p53, %p54
      %p56 = scmp.ne.s32.totalorder %s42, %s43
      %p57 = scmp.eq.s32.totalorder %s35, 1
      %p58 = por %p56, %p57
      %p60 = scmp.ne.s32.totalorder %s43, %s59
      %p61 = scmp.eq.s32.totalorder %s35, 0
      %p62 = por %p60, %p61
      %s63 = ssub.s32 %s29, %s36
      %p64 = scmp.eq.s32.totalorder %s63, 0
      %s66 = sadd.s32 %s65, 1
      %s67 = scalar_select %p64, %s65, %s66
      %p70 = pneg %p64
      %p71 = scmp.eq.s32.totalorder %s29, 1
      %p72 = por %p70, %p71
      %p73 = scmp.ne.s32.totalorder %s65, %s68
      %p74 = scmp.eq.s32.totalorder %s29, 0
      %p75 = por %p73, %p74
      %p76 = scmp.ne.s32.totalorder %s65, %s68
      %p77 = scmp.eq.s32.totalorder %s34, 1
      %p78 = por %p76, %p77
      %p79 = scmp.ne.s32.totalorder %s68, %s69
      %p80 = scmp.eq.s32.totalorder %s34, 0
      %p81 = por %p79, %p80
      %p82 = scmp.ne.s32.totalorder %s68, %s69
      %p83 = scmp.eq.s32.totalorder %s35, 1
      %p84 = por %p82, %p83
      %p86 = scmp.ne.s32.totalorder %s69, %s85
      %p87 = scmp.eq.s32.totalorder %s35, 0
      %p88 = por %p86, %p87
      %s89 = ssub.s32 %s29, %s36
      %p90 = scmp.eq.s32.totalorder %s89, 0
      %s92 = sadd.s32 %s91, 1
      %s93 = scalar_select %p90, %s91, %s92
      %p96 = pneg %p90
      %p97 = scmp.eq.s32.totalorder %s29, 1
      %p98 = por %p96, %p97
      %p99 = scmp.ne.s32.totalorder %s91, %s94
      %p100 = scmp.eq.s32.totalorder %s29, 0
      %p101 = por %p99, %p100
      %p102 = scmp.ne.s32.totalorder %s91, %s94
      %p103 = scmp.eq.s32.totalorder %s34, 1
      %p104 = por %p102, %p103
      %p105 = scmp.ne.s32.totalorder %s94, %s95
      %p106 = scmp.eq.s32.totalorder %s34, 0
      %p107 = por %p105, %p106
      %p108 = scmp.ne.s32.totalorder %s94, %s95
      %p109 = scmp.eq.s32.totalorder %s35, 1
      %p110 = por %p108, %p109
      %p112 = scmp.ne.s32.totalorder %s95, %s111
      %p113 = scmp.eq.s32.totalorder %s35, 0
      %p114 = por %p112, %p113
      %s115 = ssub.s32 %s29, %s36
      %p116 = scmp.eq.s32.totalorder %s115, 0
      %s118 = sadd.s32 %s117, 1
      %s119 = scalar_select %p116, %s117, %s118
      %p122 = pneg %p116
      %p123 = scmp.eq.s32.totalorder %s29, 1
      %p124 = por %p122, %p123
      %p125 = scmp.ne.s32.totalorder %s117, %s120
      %p126 = scmp.eq.s32.totalorder %s29, 0
      %p127 = por %p125, %p126
      %p128 = scmp.ne.s32.totalorder %s117, %s120
      %p129 = scmp.eq.s32.totalorder %s34, 1
      %p130 = por %p128, %p129
      %p131 = scmp.ne.s32.totalorder %s120, %s121
      %p132 = scmp.eq.s32.totalorder %s34, 0
      %p133 = por %p131, %p132
      %p134 = scmp.ne.s32.totalorder %s120, %s121
      %p135 = scmp.eq.s32.totalorder %s35, 1
      %p136 = por %p134, %p135
      %p138 = scmp.ne.s32.totalorder %s121, %s137
      %p139 = scmp.eq.s32.totalorder %s35, 0
      %p140 = por %p138, %p139
      %s142 = sadd.s32 %s141, 1
      %p145 = scmp.eq.s32.totalorder %s29, 1
      %p146 = scmp.ne.s32.totalorder %s141, %s143
      %p147 = scmp.eq.s32.totalorder %s29, 0
      %p148 = por %p146, %p147
      %p149 = scmp.ne.s32.totalorder %s141, %s143
      %p150 = scmp.eq.s32.totalorder %s34, 1
      %p151 = por %p149, %p150
      %p152 = scmp.ne.s32.totalorder %s143, %s144
      %p153 = scmp.eq.s32.totalorder %s34, 0
      %p154 = por %p152, %p153
      %p155 = scmp.ne.s32.totalorder %s143, %s144
      %p156 = scmp.eq.s32.totalorder %s35, 1
      %p157 = por %p155, %p156
      %p159 = scmp.ne.s32.totalorder %s144, %s158
      %p160 = scmp.eq.s32.totalorder %s35, 0
      %p161 = por %p159, %p160
      %s163 = sadd.s32 %s162, 1
      %p166 = scmp.eq.s32.totalorder %s29, 1
      %p167 = scmp.ne.s32.totalorder %s162, %s164
      %p168 = scmp.eq.s32.totalorder %s29, 0
      %p169 = por %p167, %p168
      %p170 = scmp.ne.s32.totalorder %s162, %s164
      %p171 = scmp.eq.s32.totalorder %s34, 1
      %p172 = por %p170, %p171
      %p173 = scmp.ne.s32.totalorder %s164, %s165
      %p174 = scmp.eq.s32.totalorder %s34, 0
      %p175 = por %p173, %p174
      %p176 = scmp.ne.s32.totalorder %s164, %s165
      %p177 = scmp.eq.s32.totalorder %s35, 1
      %p178 = por %p176, %p177
      %p180 = scmp.ne.s32.totalorder %s165, %s179
      %p181 = scmp.eq.s32.totalorder %s35, 0
      %p182 = por %p180, %p181
      %s184 = sadd.s32 %s183, 1
      %p187 = scmp.eq.s32.totalorder %s29, 1
      %p188 = scmp.ne.s32.totalorder %s183, %s185
      %p189 = scmp.eq.s32.totalorder %s29, 0
      %p190 = por %p188, %p189
      %p191 = scmp.ne.s32.totalorder %s183, %s185
      %p192 = scmp.eq.s32.totalorder %s34, 1
      %p193 = por %p191, %p192
      %p194 = scmp.ne.s32.totalorder %s185, %s186
      %p195 = scmp.eq.s32.totalorder %s34, 0
      %p196 = por %p194, %p195
      %p197 = scmp.ne.s32.totalorder %s185, %s186
      %p198 = scmp.eq.s32.totalorder %s35, 1
      %p199 = por %p197, %p198
      %p201 = scmp.ne.s32.totalorder %s186, %s200
      %p202 = scmp.eq.s32.totalorder %s35, 0
      %p203 = por %p201, %p202
      %s205 = sadd.s32 %s204, 1
      %p208 = scmp.eq.s32.totalorder %s29, 1
      %p209 = scmp.ne.s32.totalorder %s204, %s206
      %p210 = scmp.eq.s32.totalorder %s29, 0
      %p211 = por %p209, %p210
      %p212 = scmp.ne.s32.totalorder %s204, %s206
      %p213 = scmp.eq.s32.totalorder %s34, 1
      %p214 = por %p212, %p213
      %p215 = scmp.ne.s32.totalorder %s206, %s207
      %p216 = scmp.eq.s32.totalorder %s34, 0
      %p217 = por %p215, %p216
      %p218 = scmp.ne.s32.totalorder %s206, %s207
      %p219 = scmp.eq.s32.totalorder %s35, 1
      %p220 = por %p218, %p219
      %p222 = scmp.ne.s32.totalorder %s207, %s221
      %p223 = scmp.eq.s32.totalorder %s35, 0
      %p224 = por %p222, %p223
      %s226 = sadd.s32 %s225, 1
      %p229 = scmp.eq.s32.totalorder %s29, 1
      %p230 = scmp.ne.s32.totalorder %s225, %s227
      %p231 = scmp.eq.s32.totalorder %s29, 0
      %p232 = por %p230, %p231
      %p233 = scmp.ne.s32.totalorder %s225, %s227
      %p234 = scmp.eq.s32.totalorder %s34, 1
      %p235 = por %p233, %p234
      %p236 = scmp.ne.s32.totalorder %s227, %s228
      %p237 = scmp.eq.s32.totalorder %s34, 0
      %p238 = por %p236, %p237
      %p239 = scmp.ne.s32.totalorder %s227, %s228
      %p240 = scmp.eq.s32.totalorder %s35, 1
      %p241 = por %p239, %p240
      %p243 = scmp.ne.s32.totalorder %s228, %s242
      %p244 = scmp.eq.s32.totalorder %s35, 0
      %p245 = por %p243, %p244
      %s247 = sadd.s32 %s246, 1
      %p250 = scmp.eq.s32.totalorder %s29, 1
      %p251 = scmp.ne.s32.totalorder %s246, %s248
      %p252 = scmp.eq.s32.totalorder %s29, 0
      %p253 = por %p251, %p252
      %p254 = scmp.ne.s32.totalorder %s246, %s248
      %p255 = scmp.eq.s32.totalorder %s34, 1
      %p256 = por %p254, %p255
      %p257 = scmp.ne.s32.totalorder %s248, %s249
      %p258 = scmp.eq.s32.totalorder %s34, 0
      %p259 = por %p257, %p258
      %p260 = scmp.ne.s32.totalorder %s248, %s249
      %p261 = scmp.eq.s32.totalorder %s35, 1
      %p262 = por %p260, %p261
      %p264 = scmp.ne.s32.totalorder %s249, %s263
      %p265 = scmp.eq.s32.totalorder %s35, 0
      %p266 = por %p264, %p265
      %s268 = sadd.s32 %s267, 1
      %p271 = scmp.eq.s32.totalorder %s29, 1
      %p272 = scmp.ne.s32.totalorder %s267, %s269
      %p273 = scmp.eq.s32.totalorder %s29, 0
      %p274 = por %p272, %p273
      %p275 = scmp.ne.s32.totalorder %s267, %s269
      %p276 = scmp.eq.s32.totalorder %s34, 1
      %p277 = por %p275, %p276
      %p278 = scmp.ne.s32.totalorder %s269, %s270
      %p279 = scmp.eq.s32.totalorder %s34, 0
      %p280 = por %p278, %p279
      %p281 = scmp.ne.s32.totalorder %s269, %s270
      %p282 = scmp.eq.s32.totalorder %s35, 1
      %p283 = por %p281, %p282
      %p285 = scmp.ne.s32.totalorder %s270, %s284
      %p286 = scmp.eq.s32.totalorder %s35, 0
      %p287 = por %p285, %p286
      %s289 = sadd.s32 %s288, 1
      %p292 = scmp.eq.s32.totalorder %s29, 1
      %p293 = scmp.ne.s32.totalorder %s288, %s290
      %p294 = scmp.eq.s32.totalorder %s29, 0
      %p295 = por %p293, %p294
      %p296 = scmp.ne.s32.totalorder %s288, %s290
      %p297 = scmp.eq.s32.totalorder %s34, 1
      %p298 = por %p296, %p297
      %p299 = scmp.ne.s32.totalorder %s290, %s291
      %p300 = scmp.eq.s32.totalorder %s34, 0
      %p301 = por %p299, %p300
      %p302 = scmp.ne.s32.totalorder %s290, %s291
      %p303 = scmp.eq.s32.totalorder %s35, 1
      %p304 = por %p302, %p303
      %p306 = scmp.ne.s32.totalorder %s291, %s305
      %p307 = scmp.eq.s32.totalorder %s35, 0
      %p308 = por %p306, %p307
      %s310 = sadd.s32 %s309, 1
      %p313 = scmp.eq.s32.totalorder %s29, 1
      %p314 = scmp.ne.s32.totalorder %s309, %s311
      %p315 = scmp.eq.s32.totalorder %s29, 0
      %p316 = por %p314, %p315
      %p317 = scmp.ne.s32.totalorder %s309, %s311
      %p318 = scmp.eq.s32.totalorder %s34, 1
      %p319 = por %p317, %p318
      %p320 = scmp.ne.s32.totalorder %s311, %s312
      %p321 = scmp.eq.s32.totalorder %s34, 0
      %p322 = por %p320, %p321
      %p323 = scmp.ne.s32.totalorder %s311, %s312
      %p324 = scmp.eq.s32.totalorder %s35, 1
      %p325 = por %p323, %p324
      %p327 = scmp.ne.s32.totalorder %s312, %s326
      %p328 = scmp.eq.s32.totalorder %s35, 0
      %p329 = por %p327, %p328
      %s331 = sadd.s32 %s330, 1
      %p334 = scmp.eq.s32.totalorder %s29, 1
      %p335 = scmp.ne.s32.totalorder %s330, %s332
      %p336 = scmp.eq.s32.totalorder %s29, 0
      %p337 = por %p335, %p336
      %p338 = scmp.ne.s32.totalorder %s330, %s332
      %p339 = scmp.eq.s32.totalorder %s34, 1
      %p340 = por %p338, %p339
      %p341 = scmp.ne.s32.totalorder %s332, %s333
      %p342 = scmp.eq.s32.totalorder %s34, 0
      %p343 = por %p341, %p342
      %p344 = scmp.ne.s32.totalorder %s332, %s333
      %p345 = scmp.eq.s32.totalorder %s35, 1
      %p346 = por %p344, %p345
      %p348 = scmp.ne.s32.totalorder %s333, %s347
      %p349 = scmp.eq.s32.totalorder %s35, 0
      %p350 = por %p348, %p349
      %s352 = sadd.s32 %s351, 1
      %p355 = scmp.eq.s32.totalorder %s29, 1
      %p356 = scmp.ne.s32.totalorder %s351, %s353
      %p357 = scmp.eq.s32.totalorder %s29, 0
      %p358 = por %p356, %p357
      %p359 = scmp.ne.s32.totalorder %s351, %s353
      %p360 = scmp.eq.s32.totalorder %s34, 1
      %p361 = por %p359, %p360
      %p362 = scmp.ne.s32.totalorder %s353, %s354
      %p363 = scmp.eq.s32.totalorder %s34, 0
      %p364 = por %p362, %p363
      %p365 = scmp.ne.s32.totalorder %s353, %s354
      %p366 = scmp.eq.s32.totalorder %s35, 1
      %p367 = por %p365, %p366
      %p369 = scmp.ne.s32.totalorder %s354, %s368
      %p370 = scmp.eq.s32.totalorder %s35, 0
      %p371 = por %p369, %p370
      %s373 = sadd.s32 %s372, 1
      %p376 = scmp.eq.s32.totalorder %s29, 1
      %p377 = scmp.ne.s32.totalorder %s372, %s374
      %p378 = scmp.eq.s32.totalorder %s29, 0
      %p379 = por %p377, %p378
      %p380 = scmp.ne.s32.totalorder %s372, %s374
      %p381 = scmp.eq.s32.totalorder %s34, 1
      %p382 = por %p380, %p381
      %p383 = scmp.ne.s32.totalorder %s374, %s375
      %p384 = scmp.eq.s32.totalorder %s34, 0
      %p385 = por %p383, %p384
      %p386 = scmp.ne.s32.totalorder %s374, %s375
      %p387 = scmp.eq.s32.totalorder %s35, 1
      %p388 = por %p386, %p387
      %p390 = scmp.ne.s32.totalorder %s375, %s389
      %p391 = scmp.eq.s32.totalorder %s35, 0
      %p392 = por %p390, %p391
      %s394 = sadd.s32 %s393, 1
      %p397 = scmp.eq.s32.totalorder %s29, 1
      %p398 = scmp.ne.s32.totalorder %s393, %s395
      %p399 = scmp.eq.s32.totalorder %s29, 0
      %p400 = por %p398, %p399
      %p401 = scmp.ne.s32.totalorder %s393, %s395
      %p402 = scmp.eq.s32.totalorder %s34, 1
      %p403 = por %p401, %p402
      %p404 = scmp.ne.s32.totalorder %s395, %s396
      %p405 = scmp.eq.s32.totalorder %s34, 0
      %p406 = por %p404, %p405
      %p407 = scmp.ne.s32.totalorder %s395, %s396
      %p408 = scmp.eq.s32.totalorder %s35, 1
      %p409 = por %p407, %p408
      %p411 = scmp.ne.s32.totalorder %s396, %s410
      %p412 = scmp.eq.s32.totalorder %s35, 0
      %p413 = por %p411, %p412
      %s414 = ssub.s32 %s29, %s36
      %p415 = scmp.eq.s32.totalorder %s414, 0
      %s417 = sadd.s32 %s416, 1
      %s418 = scalar_select %p415, %s416, %s417
      %p421 = pneg %p415
      %p422 = scmp.eq.s32.totalorder %s29, 1
      %p423 = por %p421, %p422
      %p424 = scmp.ne.s32.totalorder %s416, %s419
      %p425 = scmp.eq.s32.totalorder %s29, 0
      %p426 = por %p424, %p425
      %p427 = scmp.ne.s32.totalorder %s416, %s419
      %p428 = scmp.eq.s32.totalorder %s34, 1
      %p429 = por %p427, %p428
      %p430 = scmp.ne.s32.totalorder %s419, %s420
      %p431 = scmp.eq.s32.totalorder %s34, 0
      %p432 = por %p430, %p431
      %p433 = scmp.ne.s32.totalorder %s419, %s420
      %p434 = scmp.eq.s32.totalorder %s35, 1
      %p435 = por %p433, %p434
      %p437 = scmp.ne.s32.totalorder %s420, %s436
      %p438 = scmp.eq.s32.totalorder %s35, 0
      %p439 = por %p437, %p438
      %p440 = scmp.le.s32.totalorder 1, %s29
      %p441 = scmp.lt.s32.totalorder %s29, 3
      %p442 = pnand %p440, %p441
      %p443 = pneg %p442
      // Predicated region
      $region9: #{tpu_custom_call.1} parent=5 // pred_check
        _
      $region10: #{tpu_custom_call.1} parent=5 // pred_check_branch
        %445 = sbr.rel (%p442) target = $region12
      $region11: #{tpu_custom_call.1} parent=5 // pred_region
        %s446 = ssub.s32 %s29, 1
        // Predicated region
        $region13: #{tpu_custom_call.1} parent=11 // pred_check
          %p447 = pneg %p154
        $region14: #{tpu_custom_call.1} parent=11 // pred_check_branch
          %449 = sbr.rel (%p447) target = $region16
        $region15: #{tpu_custom_call.1} parent=11 // pred_region
          _
        $region16: #{tpu_custom_call.1} parent=11 // pred_fallthru
          _
        // Predicated region
        $region17: #{tpu_custom_call.1} parent=11 // pred_check
          %p450 = pneg %p175
        $region18: #{tpu_custom_call.1} parent=11 // pred_check_branch
          %452 = sbr.rel (%p450) target = $region20
        $region19: #{tpu_custom_call.1} parent=11 // pred_region
          %s454 = ssub.s32 4096, 4096
          %455 = vsyncadd [#allocation3], %s454
          %s456 = sshll.u32 [#allocation2], 4
          %s457 = int_to_ptr.vmem [resolvable:$true] %s456
          %462 = dma.hbm_to_vmem [thread:$0]  %s5, 4096, %s457, [#allocation3], 128, 128, 8
        $region20: #{tpu_custom_call.1} parent=11 // pred_fallthru
          _
        // Predicated region
        $region21: #{tpu_custom_call.1} parent=11 // pred_check
          %p463 = pneg %p196
        $region22: #{tpu_custom_call.1} parent=11 // pred_check_branch
          %465 = sbr.rel (%p463) target = $region24
        $region23: #{tpu_custom_call.1} parent=11 // pred_region
          %s467 = ssub.s32 4096, 4096
          %468 = vsyncadd [#allocation6], %s467
          %s469 = sshll.u32 [#allocation5], 4
          %s470 = int_to_ptr.vmem [resolvable:$true] %s469
          %475 = dma.hbm_to_vmem [thread:$0]  %s6, 4096, %s470, [#allocation6], 128, 128, 8
        $region24: #{tpu_custom_call.1} parent=11 // pred_fallthru
          _
        // Predicated region
        $region25: #{tpu_custom_call.1} parent=11 // pred_check
          %p476 = pneg %p217
        $region26: #{tpu_custom_call.1} parent=11 // pred_check_branch
          %478 = sbr.rel (%p476) target = $region28
        $region27: #{tpu_custom_call.1} parent=11 // pred_region
          %s480 = ssub.s32 4096, 4096
          %481 = vsyncadd [#allocation6], %s480
          %s482 = sshll.u32 [#allocation7], 4
          %s483 = int_to_ptr.vmem [resolvable:$true] %s482
          %488 = dma.hbm_to_vmem [thread:$0]  %s7, 4096, %s483, [#allocation6], 128, 128, 8
        $region28: #{tpu_custom_call.1} parent=11 // pred_fallthru
          _
        // Predicated region
        $region29: #{tpu_custom_call.1} parent=11 // pred_check
          %p489 = pneg %p238
        $region30: #{tpu_custom_call.1} parent=11 // pred_check_branch
          %491 = sbr.rel (%p489) target = $region32
        $region31: #{tpu_custom_call.1} parent=11 // pred_region
          %s493 = ssub.s32 4096, 4096
          %494 = vsyncadd [#allocation9], %s493
          %s495 = sshll.u32 [#allocation8], 4
          %s496 = int_to_ptr.vmem [resolvable:$true] %s495
          %501 = dma.hbm_to_vmem [thread:$0]  %s8, 4096, %s496, [#allocation9], 128, 128, 8
        $region32: #{tpu_custom_call.1} parent=11 // pred_fallthru
          _
        // Predicated region
        $region33: #{tpu_custom_call.1} parent=11 // pred_check
          %p502 = pneg %p259
        $region34: #{tpu_custom_call.1} parent=11 // pred_check_branch
          %504 = sbr.rel (%p502) target = $region36
        $region35: #{tpu_custom_call.1} parent=11 // pred_region
          _
        $region36: #{tpu_custom_call.1} parent=11 // pred_fallthru
          _
        // Predicated region
        $region37: #{tpu_custom_call.1} parent=11 // pred_check
          %p505 = pneg %p280
        $region38: #{tpu_custom_call.1} parent=11 // pred_check_branch
          %507 = sbr.rel (%p505) target = $region40
        $region39: #{tpu_custom_call.1} parent=11 // pred_region
          _
        $region40: #{tpu_custom_call.1} parent=11 // pred_fallthru
          _
        // Predicated region
        $region41: #{tpu_custom_call.1} parent=11 // pred_check
          %p508 = pneg %p301
        $region42: #{tpu_custom_call.1} parent=11 // pred_check_branch
          %510 = sbr.rel (%p508) target = $region44
        $region43: #{tpu_custom_call.1} parent=11 // pred_region
          _
        $region44: #{tpu_custom_call.1} parent=11 // pred_fallthru
          _
        // Predicated region
        $region45: #{tpu_custom_call.1} parent=11 // pred_check
          %p511 = pneg %p322
        $region46: #{tpu_custom_call.1} parent=11 // pred_check_branch
          %513 = sbr.rel (%p511) target = $region48
        $region47: #{tpu_custom_call.1} parent=11 // pred_region
          _
        $region48: #{tpu_custom_call.1} parent=11 // pred_fallthru
          _
        // Predicated region
        $region49: #{tpu_custom_call.1} parent=11 // pred_check
          %p514 = pneg %p343
        $region50: #{tpu_custom_call.1} parent=11 // pred_check_branch
          %516 = sbr.rel (%p514) target = $region52
        $region51: #{tpu_custom_call.1} parent=11 // pred_region
          _
        $region52: #{tpu_custom_call.1} parent=11 // pred_fallthru
          _
        // Predicated region
        $region53: #{tpu_custom_call.1} parent=11 // pred_check
          %p517 = pneg %p364
        $region54: #{tpu_custom_call.1} parent=11 // pred_check_branch
          %519 = sbr.rel (%p517) target = $region56
        $region55: #{tpu_custom_call.1} parent=11 // pred_region
          _
        $region56: #{tpu_custom_call.1} parent=11 // pred_fallthru
          _
        // Predicated region
        $region57: #{tpu_custom_call.1} parent=11 // pred_check
          %p520 = pneg %p385
        $region58: #{tpu_custom_call.1} parent=11 // pred_check_branch
          %522 = sbr.rel (%p520) target = $region60
        $region59: #{tpu_custom_call.1} parent=11 // pred_region
          _
        $region60: #{tpu_custom_call.1} parent=11 // pred_fallthru
          _
        // Predicated region
        $region61: #{tpu_custom_call.1} parent=11 // pred_check
          %p523 = pneg %p406
        $region62: #{tpu_custom_call.1} parent=11 // pred_check_branch
          %525 = sbr.rel (%p523) target = $region64
        $region63: #{tpu_custom_call.1} parent=11 // pred_region
          _
        $region64: #{tpu_custom_call.1} parent=11 // pred_fallthru
          _
      $region12: #{tpu_custom_call.1} parent=5 // pred_fallthru
        _
      %p526 = scmp.lt.s32.totalorder %s29, 2
      // Predicated region
      $region65: #{tpu_custom_call.1} parent=5 // pred_check
        %p527 = pneg %p526
      $region66: #{tpu_custom_call.1} parent=5 // pred_check_branch
        %529 = sbr.rel (%p527) target = $region68
      $region67: #{tpu_custom_call.1} parent=5 // pred_region
        // Predicated region
        $region69: #{tpu_custom_call.1} parent=67 // pred_check
          %p530 = pneg %p49
        $region70: #{tpu_custom_call.1} parent=67 // pred_check_branch
          %532 = sbr.rel (%p530) target = $region72
        $region71: #{tpu_custom_call.1} parent=67 // pred_region
          %s533 = smul.u32 2, %s29
          %p534 = scmp.lt.s32.totalorder %s533, 3
          %s535 = scalar_select %p534, %s533, 3
          %s536 = smul.addr %s535, 4
          %s537 = scalar_lea.vmem %s0, %s536
          %s538 = smul.u32 2, %s29
        $region72: #{tpu_custom_call.1} parent=67 // pred_fallthru
          _
        // Predicated region
        $region73: #{tpu_custom_call.1} parent=67 // pred_check
          %p539 = pneg %p75
        $region74: #{tpu_custom_call.1} parent=67 // pred_check_branch
          %541 = sbr.rel (%p539) target = $region76
        $region75: #{tpu_custom_call.1} parent=67 // pred_region
          %s542 = smul.u32 2, %s29
          %p543 = scmp.lt.s32.totalorder %s542, 3
          %s544 = scalar_select %p543, %s542, 3
          %s545 = smul.addr %s544, 2
          %s546 = smul.addr %s545, 4
          %s547 = scalar_lea.vmem %s1, %s546
          %s548 = smul.u32 2, %s29
        $region76: #{tpu_custom_call.1} parent=67 // pred_fallthru
          _
        // Predicated region
        $region77: #{tpu_custom_call.1} parent=67 // pred_check
          %p549 = pneg %p101
        $region78: #{tpu_custom_call.1} parent=67 // pred_check_branch
          %551 = sbr.rel (%p549) target = $region80
        $region79: #{tpu_custom_call.1} parent=67 // pred_region
          %s552 = smul.u32 2, %s29
          %p553 = scmp.lt.s32.totalorder %s552, 3
          %s554 = scalar_select %p553, %s552, 3
          %s555 = smul.addr %s554, 2
          %s556 = smul.addr %s555, 4
          %s557 = scalar_lea.vmem %s2, %s556
          %s558 = smul.u32 2, %s29
        $region80: #{tpu_custom_call.1} parent=67 // pred_fallthru
          _
        // Predicated region
        $region81: #{tpu_custom_call.1} parent=67 // pred_check
          %p559 = pneg %p127
        $region82: #{tpu_custom_call.1} parent=67 // pred_check_branch
          %561 = sbr.rel (%p559) target = $region84
        $region83: #{tpu_custom_call.1} parent=67 // pred_region
          %s562 = smul.u32 2, %s29
          %p563 = scmp.lt.s32.totalorder %s562, 3
          %s564 = scalar_select %p563, %s562, 3
          %s565 = smul.addr %s564, 4
          %s566 = scalar_lea.vmem %s3, %s565
          %s567 = smul.u32 2, %s29
        $region84: #{tpu_custom_call.1} parent=67 // pred_fallthru
          _
      $region68: #{tpu_custom_call.1} parent=5 // pred_fallthru
        _
      %p568 = scmp.le.s32.totalorder 1, %s29
      %p569 = scmp.lt.s32.totalorder %s29, 3
      %p570 = pnand %p568, %p569
      %p571 = pneg %p570
      // Predicated region
      $region85: #{tpu_custom_call.1} parent=5 // pred_check
        _
      $region86: #{tpu_custom_call.1} parent=5 // pred_check_branch
        %573 = sbr.rel (%p570) target = $region88
      $region87: #{tpu_custom_call.1} parent=5 // pred_region
        %s574 = ssub.s32 %s29, 1
        // Predicated region
        $region89: #{tpu_custom_call.1} parent=87 // pred_check
          %p575 = pneg %p175
        $region90: #{tpu_custom_call.1} parent=87 // pred_check_branch
          %577 = sbr.rel (%p575) target = $region92
        $region91: #{tpu_custom_call.1} parent=87 // pred_region
          %578 = dma.done [#allocation3], 4096
        $region92: #{tpu_custom_call.1} parent=87 // pred_fallthru
          _
        // Predicated region
        $region93: #{tpu_custom_call.1} parent=87 // pred_check
          %p579 = pneg %p196
        $region94: #{tpu_custom_call.1} parent=87 // pred_check_branch
          %581 = sbr.rel (%p579) target = $region96
        $region95: #{tpu_custom_call.1} parent=87 // pred_region
          %582 = dma.done [#allocation6], 4096
        $region96: #{tpu_custom_call.1} parent=87 // pred_fallthru
          _
        // Predicated region
        $region97: #{tpu_custom_call.1} parent=87 // pred_check
          %p583 = pneg %p217
        $region98: #{tpu_custom_call.1} parent=87 // pred_check_branch
          %585 = sbr.rel (%p583) target = $region100
        $region99: #{tpu_custom_call.1} parent=87 // pred_region
          %586 = dma.done [#allocation6], 4096
        $region100: #{tpu_custom_call.1} parent=87 // pred_fallthru
          _
        // Predicated region
        $region101: #{tpu_custom_call.1} parent=87 // pred_check
          %p587 = pneg %p238
        $region102: #{tpu_custom_call.1} parent=87 // pred_check_branch
          %589 = sbr.rel (%p587) target = $region104
        $region103: #{tpu_custom_call.1} parent=87 // pred_region
          %590 = dma.done [#allocation9], 4096
        $region104: #{tpu_custom_call.1} parent=87 // pred_fallthru
          _
        %s591 = smul.u32 2, %s34
        %p592 = scmp.lt.s32.totalorder %s591, 3
        %s593 = scalar_select %p592, %s591, 3
        %s594 = smul.addr %s593, 4
        %s595 = scalar_lea.vmem %s0, %s594
        %p596 = pneg %p55
        %p597 = pneg %p52
        %s598 = smul.u32 2, %s34
        %p599 = scmp.lt.s32.totalorder %s598, 3
        %s600 = scalar_select %p599, %s598, 3
        %s601 = smul.addr %s600, 2
        %s602 = smul.addr %s601, 4
        %s603 = scalar_lea.vmem %s1, %s602
        %p604 = pneg %p81
        %p605 = pneg %p78
        %s606 = smul.u32 2, %s34
        %p607 = scmp.lt.s32.totalorder %s606, 3
        %s608 = scalar_select %p607, %s606, 3
        %s609 = smul.addr %s608, 2
        %s610 = smul.addr %s609, 4
        %s611 = scalar_lea.vmem %s2, %s610
        %p612 = pneg %p107
        %p613 = pneg %p104
        %s614 = smul.u32 2, %s34
        %p615 = scmp.lt.s32.totalorder %s614, 3
        %s616 = scalar_select %p615, %s614, 3
        %s617 = smul.addr %s616, 4
        %s618 = scalar_lea.vmem %s3, %s617
        %p619 = pneg %p133
        %p620 = pneg %p130
        %p621 = pneg %p154
        %p622 = pneg %p151
        %p623 = pneg %p175
        %p624 = pneg %p172
        %p625 = pneg %p196
        %p626 = pneg %p193
        %p627 = pneg %p217
        %p628 = pneg %p214
        %p629 = pneg %p238
        %p630 = pneg %p235
        %p631 = pneg %p259
        %p632 = pneg %p256
        %p633 = pneg %p280
        %p634 = pneg %p277
        %p635 = pneg %p301
        %p636 = pneg %p298
        %p637 = pneg %p322
        %p638 = pneg %p319
        %p639 = pneg %p343
        %p640 = pneg %p340
        %p641 = pneg %p364
        %p642 = pneg %p361
        %p643 = pneg %p385
        %p644 = pneg %p382
        %p645 = pneg %p406
        %p646 = pneg %p403
        %p647 = pneg %p432
        %p648 = pneg %p429
        %s649 = sand.u32 %s419, 1
        %s650 = scalar_lea.sflag [#allocation4], %s649
        %s651 = sand.u32 %s419, 1
        %s652 = smul.addr %s651, 16
        %s653 = scalar_lea.vmem [#allocation10], %s652
        %s654 = smul.u32 2, %s34
        %p655 = scmp.lt.s32.totalorder %s654, 3
        %s656 = scalar_select %p655, %s654, 3
        %s657 = smul.addr %s656, 4
        %s658 = scalar_lea.vmem %s0, %s657
        %s659 = smul.u32 2, %s34
        %s660 = smul.u32 2, %s34
        %p661 = scmp.lt.s32.totalorder %s660, 3
        %s662 = scalar_select %p661, %s660, 3
        %s663 = smul.addr %s662, 2
        %s664 = smul.addr %s663, 4
        %s665 = scalar_lea.vmem %s1, %s664
        %s666 = smul.u32 2, %s34
        %s667 = smul.u32 2, %s34
        %p668 = scmp.lt.s32.totalorder %s667, 3
        %s669 = scalar_select %p668, %s667, 3
        %s670 = smul.addr %s669, 2
        %s671 = smul.addr %s670, 4
        %s672 = scalar_lea.vmem %s2, %s671
        %s673 = smul.u32 2, %s34
        %s674 = smul.u32 2, %s34
        %p675 = scmp.lt.s32.totalorder %s674, 3
        %s676 = scalar_select %p675, %s674, 3
        %s677 = smul.addr %s676, 4
        %s678 = scalar_lea.vmem %s3, %s677
        %s679 = smul.u32 2, %s34
        %s680 = smul.u32 2, %s34
        %v682 = vld [vmem:[%s14] sm:$0xff]
        %v683 = vld [vmem:[%s14 + $0x8] sm:$0xff]
        %v684 = vld [vmem:[%s15] sm:$0xff]
        %v685 = vld [vmem:[%s658] sm:$0xf]
        %v686 = vld [vmem:[%s658 + $0x4] sm:$0xf]
        %v687 = vld [vmem:[%s665] sm:$0xff]
        %v688 = vld [vmem:[%s665 + $0x8] sm:$0xff]
        %v689 = vld [vmem:[%s672] sm:$0xff]
        %v690 = vld [vmem:[%s672 + $0x8] sm:$0xff]
        %v691 = vld [vmem:[%s678] sm:$0xf]
        %v692 = vld [vmem:[%s678 + $0x4] sm:$0xf]
        %v693 = vld [vmem:[%s4] sm:$0xff]
        %v694 = vld [vmem:[%s4 + $0x8] sm:$0xff]
        %v695 = vld [vmem:[%s4 + $0x10] sm:$0xff]
        %v696 = vld [vmem:[%s4 + $0x18] sm:$0xff]
        %v697 = vlaneseq
        %v698 = vshrl.u32 %v697, 7
        %v699 = vsub.s32 0, %v698
        %v700 = vrot.slane %v682, %v699
        %v701 = vlaneseq
        %v702 = vshrl.u32 %v701, 7
        %v703 = vsub.s32 0, %v702
        %v704 = vrot.slane %v683, %v703
        %v707 = vunpack.c.l.b16 %v685
        %v708 = vunpack.c.l.b16 %v686
        %v709 = vpack.c.b16 %v708, %v707
        %v714 = vunpack.c.l.b16 %v693
        %v715 = vunpack.c.h.b16 %v693
        %v716 = vunpack.c.l.b16 %v694
        %v717 = vunpack.c.h.b16 %v694
        %v718 = vunpack.c.l.b16 %v695
        %v719 = vunpack.c.h.b16 %v695
        %v720 = vunpack.c.l.b16 %v696
        %v721 = vunpack.c.h.b16 %v696
        %v722 = vpack.c.b16 %v716, %v714
        %v723 = vpack.c.b16 %v717, %v715
        %v724 = vpack.c.b16 %v720, %v718
        %v725 = vpack.c.b16 %v721, %v719
        %vm730 = vcmask 261120
        %v732 = vsel %vm730, %v709, 0
        %734 = vmatprep.subr.bf16.mxu0 %v723
        %735 = vmatpush1.bf16.msra.mxu0 %v722
        %736 = vmatprep.subr.bf16.mxu0 %v725
        %737 = vmatpush1.bf16.msra.mxu0 %v724
        %738 = vmatprep.subr.bf16.mxu0 0
        %739 = vmatpush1.bf16.msra.mxu0 0
        %740 = vmatprep.subr.bf16.mxu0 0
        %741 = vmatpush1.bf16.msra.mxu0 0
        %742 = vmatprep.subr.bf16.mxu0 0
        %743 = vmatpush1.bf16.msra.mxu0 0
        %744 = vmatprep.subr.bf16.mxu0 0
        %745 = vmatpush1.bf16.msra.mxu0 0
        %746 = vmatprep.subr.bf16.mxu0 0
        %747 = vmatpush1.bf16.msra.mxu0 0
        %748 = vmatprep.subr.bf16.mxu0 0
        %749 = vmatpush1.bf16.msra.mxu0 0
        %750 = vmatprep.subr.bf16.mxu0 0
        %751 = vmatpush1.bf16.msra.mxu0 0
        %752 = vmatprep.subr.bf16.mxu0 0
        %753 = vmatpush1.bf16.msra.mxu0 0
        %754 = vmatprep.subr.bf16.mxu0 0
        %755 = vmatpush1.bf16.msra.mxu0 0
        %756 = vmatprep.subr.bf16.mxu0 0
        %757 = vmatpush1.bf16.msra.mxu0 0
        %758 = vmatprep.subr.bf16.mxu0 0
        %759 = vmatpush1.bf16.msra.mxu0 0
        %760 = vmatprep.subr.bf16.mxu0 0
        %761 = vmatpush1.bf16.msra.mxu0 0
        %762 = vmatprep.subr.bf16.mxu0 0
        %763 = vmatpush1.bf16.msra.mxu0 0
        %764 = vmatprep.subr.bf16.mxu0 0
        %765 = vmatpush1.bf16.msra.mxu0 0
        %766 = vmatprep.mubr.bf16.mxu0 0
        %767 = vmatmul.mubr.bf16.gmra.mrb[0].mxu0 %v732
        %v768 = vpop.f32.mrb[0].mxu0
        %v769 = vadd.f32 %v700, %v768
        %v770 = vpop.f32.mrb[0].mxu0
        %v771 = vadd.f32 %v704, %v770
        %v772 = vpop.f32.mrb[0].mxu0
        %v773 = vadd.f32 %v700, %v772
        %v774 = vpop.f32.mrb[0].mxu0
        %v775 = vadd.f32 %v704, %v774
        %776 = vdwg.mxu0
        %v777 = vld [vmem:[#allocation2] sm:$0xff]
        %v778 = vld [vmem:[#allocation2 + $0x8] sm:$0xff]
        %v779 = vld [vmem:[#allocation2 + $0x10] sm:$0xff]
        %v780 = vld [vmem:[#allocation2 + $0x18] sm:$0xff]
        %v781 = vld [vmem:[#allocation2 + $0x20] sm:$0xff]
        %v782 = vld [vmem:[#allocation2 + $0x28] sm:$0xff]
        %v783 = vld [vmem:[#allocation2 + $0x30] sm:$0xff]
        %v784 = vld [vmem:[#allocation2 + $0x38] sm:$0xff]
        %v785 = vld [vmem:[#allocation2 + $0x40] sm:$0xff]
        %v786 = vld [vmem:[#allocation2 + $0x48] sm:$0xff]
        %v787 = vld [vmem:[#allocation2 + $0x50] sm:$0xff]
        %v788 = vld [vmem:[#allocation2 + $0x58] sm:$0xff]
        %v789 = vld [vmem:[#allocation2 + $0x60] sm:$0xff]
        %v790 = vld [vmem:[#allocation2 + $0x68] sm:$0xff]
        %v791 = vld [vmem:[#allocation2 + $0x70] sm:$0xff]
        %v792 = vld [vmem:[#allocation2 + $0x78] sm:$0xff]
        %v793 = vld [vmem:[#allocation2 + $0x80] sm:$0xff]
        %v794 = vld [vmem:[#allocation2 + $0x88] sm:$0xff]
        %v795 = vld [vmem:[#allocation2 + $0x90] sm:$0xff]
        %v796 = vld [vmem:[#allocation2 + $0x98] sm:$0xff]
        %v797 = vld [vmem:[#allocation2 + $0xa0] sm:$0xff]
        %v798 = vld [vmem:[#allocation2 + $0xa8] sm:$0xff]
        %v799 = vld [vmem:[#allocation2 + $0xb0] sm:$0xff]
        %v800 = vld [vmem:[#allocation2 + $0xb8] sm:$0xff]
        %v801 = vld [vmem:[#allocation2 + $0xc0] sm:$0xff]
        %v802 = vld [vmem:[#allocation2 + $0xc8] sm:$0xff]
        %v803 = vld [vmem:[#allocation2 + $0xd0] sm:$0xff]
        %v804 = vld [vmem:[#allocation2 + $0xd8] sm:$0xff]
        %v805 = vld [vmem:[#allocation2 + $0xe0] sm:$0xff]
        %v806 = vld [vmem:[#allocation2 + $0xe8] sm:$0xff]
        %v807 = vld [vmem:[#allocation2 + $0xf0] sm:$0xff]
        %v808 = vld [vmem:[#allocation2 + $0xf8] sm:$0xff]
        %v809 = vlaneseq
        %v810 = vshrl.u32 %v809, 7
        %v811 = vsub.s32 2, %v810
        %v812 = vrot.slane %v682, %v811
        %v813 = vlaneseq
        %v814 = vshrl.u32 %v813, 7
        %v815 = vsub.s32 2, %v814
        %v816 = vrot.slane %v683, %v815
        %v819 = vunpack.c.l.b16 %v687
        %v820 = vunpack.c.h.b16 %v687
        %v821 = vunpack.c.l.b16 %v688
        %v822 = vunpack.c.h.b16 %v688
        %v823 = vpack.c.b16 %v821, %v819
        %v824 = vpack.c.b16 %v822, %v820
        %v859 = vunpack.c.l.b16 %v777
        %v860 = vunpack.c.h.b16 %v777
        %v861 = vunpack.c.l.b16 %v778
        %v862 = vunpack.c.h.b16 %v778
        %v863 = vunpack.c.l.b16 %v779
        %v864 = vunpack.c.h.b16 %v779
        %v865 = vunpack.c.l.b16 %v780
        %v866 = vunpack.c.h.b16 %v780
        %v867 = vunpack.c.l.b16 %v781
        %v868 = vunpack.c.h.b16 %v781
        %v869 = vunpack.c.l.b16 %v782
        %v870 = vunpack.c.h.b16 %v782
        %v871 = vunpack.c.l.b16 %v783
        %v872 = vunpack.c.h.b16 %v783
        %v873 = vunpack.c.l.b16 %v784
        %v874 = vunpack.c.h.b16 %v784
        %v875 = vunpack.c.l.b16 %v785
        %v876 = vunpack.c.h.b16 %v785
        %v877 = vunpack.c.l.b16 %v786
        %v878 = vunpack.c.h.b16 %v786
        %v879 = vunpack.c.l.b16 %v787
        %v880 = vunpack.c.h.b16 %v787
        %v881 = vunpack.c.l.b16 %v788
        %v882 = vunpack.c.h.b16 %v788
        %v883 = vunpack.c.l.b16 %v789
        %v884 = vunpack.c.h.b16 %v789
        %v885 = vunpack.c.l.b16 %v790
        %v886 = vunpack.c.h.b16 %v790
        %v887 = vunpack.c.l.b16 %v791
        %v888 = vunpack.c.h.b16 %v791
        %v889 = vunpack.c.l.b16 %v792
        %v890 = vunpack.c.h.b16 %v792
        %v891 = vunpack.c.l.b16 %v793
        %v892 = vunpack.c.h.b16 %v793
        %v893 = vunpack.c.l.b16 %v794
        %v894 = vunpack.c.h.b16 %v794
        %v895 = vunpack.c.l.b16 %v795
        %v896 = vunpack.c.h.b16 %v795
        %v897 = vunpack.c.l.b16 %v796
        %v898 = vunpack.c.h.b16 %v796
        %v899 = vunpack.c.l.b16 %v797
        %v900 = vunpack.c.h.b16 %v797
        %v901 = vunpack.c.l.b16 %v798
        %v902 = vunpack.c.h.b16 %v798
        %v903 = vunpack.c.l.b16 %v799
        %v904 = vunpack.c.h.b16 %v799
        %v905 = vunpack.c.l.b16 %v800
        %v906 = vunpack.c.h.b16 %v800
        %v907 = vunpack.c.l.b16 %v801
        %v908 = vunpack.c.h.b16 %v801
        %v909 = vunpack.c.l.b16 %v802
        %v910 = vunpack.c.h.b16 %v802
        %v911 = vunpack.c.l.b16 %v803
        %v912 = vunpack.c.h.b16 %v803
        %v913 = vunpack.c.l.b16 %v804
        %v914 = vunpack.c.h.b16 %v804
        %v915 = vunpack.c.l.b16 %v805
        %v916 = vunpack.c.h.b16 %v805
        %v917 = vunpack.c.l.b16 %v806
        %v918 = vunpack.c.h.b16 %v806
        %v919 = vunpack.c.l.b16 %v807
        %v920 = vunpack.c.h.b16 %v807
        %v921 = vunpack.c.l.b16 %v808
        %v922 = vunpack.c.h.b16 %v808
        %v923 = vpack.c.b16 %v861, %v859
        %v924 = vpack.c.b16 %v862, %v860
        %v925 = vpack.c.b16 %v865, %v863
        %v926 = vpack.c.b16 %v866, %v864
        %v927 = vpack.c.b16 %v869, %v867
        %v928 = vpack.c.b16 %v870, %v868
        %v929 = vpack.c.b16 %v873, %v871
        %v930 = vpack.c.b16 %v874, %v872
        %v931 = vpack.c.b16 %v877, %v875
        %v932 = vpack.c.b16 %v878, %v876
        %v933 = vpack.c.b16 %v881, %v879
        %v934 = vpack.c.b16 %v882, %v880
        %v935 = vpack.c.b16 %v885, %v883
        %v936 = vpack.c.b16 %v886, %v884
        %v937 = vpack.c.b16 %v889, %v887
        %v938 = vpack.c.b16 %v890, %v888
        %v939 = vpack.c.b16 %v893, %v891
        %v940 = vpack.c.b16 %v894, %v892
        %v941 = vpack.c.b16 %v897, %v895
        %v942 = vpack.c.b16 %v898, %v896
        %v943 = vpack.c.b16 %v901, %v899
        %v944 = vpack.c.b16 %v902, %v900
        %v945 = vpack.c.b16 %v905, %v903
        %v946 = vpack.c.b16 %v906, %v904
        %v947 = vpack.c.b16 %v909, %v907
        %v948 = vpack.c.b16 %v910, %v908
        %v949 = vpack.c.b16 %v913, %v911
        %v950 = vpack.c.b16 %v914, %v912
        %v951 = vpack.c.b16 %v917, %v915
        %v952 = vpack.c.b16 %v918, %v916
        %v953 = vpack.c.b16 %v921, %v919
        %v954 = vpack.c.b16 %v922, %v920
        %987 = vmatprep.subr.bf16.mxu0 %v924
        %988 = vmatpush1.bf16.msra.mxu0 %v923
        %989 = vmatprep.subr.bf16.mxu0 %v926
        %990 = vmatpush1.bf16.msra.mxu0 %v925
        %991 = vmatprep.subr.bf16.mxu0 %v928
        %992 = vmatpush1.bf16.msra.mxu0 %v927
        %993 = vmatprep.subr.bf16.mxu0 %v930
        %994 = vmatpush1.bf16.msra.mxu0 %v929
        %995 = vmatprep.subr.bf16.mxu0 %v932
        %996 = vmatpush1.bf16.msra.mxu0 %v931
        %997 = vmatprep.subr.bf16.mxu0 %v934
        %998 = vmatpush1.bf16.msra.mxu0 %v933
        %999 = vmatprep.subr.bf16.mxu0 %v936
        %1000 = vmatpush1.bf16.msra.mxu0 %v935
        %1001 = vmatprep.subr.bf16.mxu0 %v938
        %1002 = vmatpush1.bf16.msra.mxu0 %v937
        %1003 = vmatprep.subr.bf16.mxu0 %v940
        %1004 = vmatpush1.bf16.msra.mxu0 %v939
        %1005 = vmatprep.subr.bf16.mxu0 %v942
        %1006 = vmatpush1.bf16.msra.mxu0 %v941
        %1007 = vmatprep.subr.bf16.mxu0 %v944
        %1008 = vmatpush1.bf16.msra.mxu0 %v943
        %1009 = vmatprep.subr.bf16.mxu0 %v946
        %1010 = vmatpush1.bf16.msra.mxu0 %v945
        %1011 = vmatprep.subr.bf16.mxu0 %v948
        %1012 = vmatpush1.bf16.msra.mxu0 %v947
        %1013 = vmatprep.subr.bf16.mxu0 %v950
        %1014 = vmatpush1.bf16.msra.mxu0 %v949
        %1015 = vmatprep.subr.bf16.mxu0 %v952
        %1016 = vmatpush1.bf16.msra.mxu0 %v951
        %1017 = vmatprep.subr.bf16.mxu0 %v954
        %1018 = vmatpush1.bf16.msra.mxu0 %v953
        %1019 = vmatprep.mubr.bf16.mxu0 %v824
        %1020 = vmatmul.mubr.bf16.gmra.mrb[0].mxu0 %v823
        %v1021 = vpop.f32.mrb[0].mxu0
        %v1022 = vadd.f32 %v812, %v1021
        %v1023 = vpop.f32.mrb[0].mxu0
        %v1024 = vadd.f32 %v816, %v1023
        %v1025 = vpop.f32.mrb[0].mxu0
        %v1026 = vadd.f32 %v812, %v1025
        %v1027 = vpop.f32.mrb[0].mxu0
        %v1028 = vadd.f32 %v816, %v1027
        %1029 = vdwg.mxu0
        %v1030 = vld [vmem:[#allocation5] sm:$0xff]
        %v1031 = vld [vmem:[#allocation5 + $0x8] sm:$0xff]
        %v1032 = vld [vmem:[#allocation5 + $0x10] sm:$0xff]
        %v1033 = vld [vmem:[#allocation5 + $0x18] sm:$0xff]
        %v1034 = vld [vmem:[#allocation5 + $0x20] sm:$0xff]
        %v1035 = vld [vmem:[#allocation5 + $0x28] sm:$0xff]
        %v1036 = vld [vmem:[#allocation5 + $0x30] sm:$0xff]
        %v1037 = vld [vmem:[#allocation5 + $0x38] sm:$0xff]
        %v1038 = vld [vmem:[#allocation5 + $0x40] sm:$0xff]
        %v1039 = vld [vmem:[#allocation5 + $0x48] sm:$0xff]
        %v1040 = vld [vmem:[#allocation5 + $0x50] sm:$0xff]
        %v1041 = vld [vmem:[#allocation5 + $0x58] sm:$0xff]
        %v1042 = vld [vmem:[#allocation5 + $0x60] sm:$0xff]
        %v1043 = vld [vmem:[#allocation5 + $0x68] sm:$0xff]
        %v1044 = vld [vmem:[#allocation5 + $0x70] sm:$0xff]
        %v1045 = vld [vmem:[#allocation5 + $0x78] sm:$0xff]
        %v1046 = vld [vmem:[#allocation5 + $0x80] sm:$0xff]
        %v1047 = vld [vmem:[#allocation5 + $0x88] sm:$0xff]
        %v1048 = vld [vmem:[#allocation5 + $0x90] sm:$0xff]
        %v1049 = vld [vmem:[#allocation5 + $0x98] sm:$0xff]
        %v1050 = vld [vmem:[#allocation5 + $0xa0] sm:$0xff]
        %v1051 = vld [vmem:[#allocation5 + $0xa8] sm:$0xff]
        %v1052 = vld [vmem:[#allocation5 + $0xb0] sm:$0xff]
        %v1053 = vld [vmem:[#allocation5 + $0xb8] sm:$0xff]
        %v1054 = vld [vmem:[#allocation5 + $0xc0] sm:$0xff]
        %v1055 = vld [vmem:[#allocation5 + $0xc8] sm:$0xff]
        %v1056 = vld [vmem:[#allocation5 + $0xd0] sm:$0xff]
        %v1057 = vld [vmem:[#allocation5 + $0xd8] sm:$0xff]
        %v1058 = vld [vmem:[#allocation5 + $0xe0] sm:$0xff]
        %v1059 = vld [vmem:[#allocation5 + $0xe8] sm:$0xff]
        %v1060 = vld [vmem:[#allocation5 + $0xf0] sm:$0xff]
        %v1061 = vld [vmem:[#allocation5 + $0xf8] sm:$0xff]
        %v1062 = vlaneseq
        %v1063 = vshrl.u32 %v1062, 7
        %v1064 = vsub.s32 3, %v1063
        %v1065 = vrot.slane %v682, %v1064
        %v1066 = vlaneseq
        %v1067 = vshrl.u32 %v1066, 7
        %v1068 = vsub.s32 3, %v1067
        %v1069 = vrot.slane %v683, %v1068
        %v1102 = vunpack.c.l.b16 %v1030
        %v1103 = vunpack.c.h.b16 %v1030
        %v1104 = vunpack.c.l.b16 %v1031
        %v1105 = vunpack.c.h.b16 %v1031
        %v1106 = vunpack.c.l.b16 %v1032
        %v1107 = vunpack.c.h.b16 %v1032
        %v1108 = vunpack.c.l.b16 %v1033
        %v1109 = vunpack.c.h.b16 %v1033
        %v1110 = vunpack.c.l.b16 %v1034
        %v1111 = vunpack.c.h.b16 %v1034
        %v1112 = vunpack.c.l.b16 %v1035
        %v1113 = vunpack.c.h.b16 %v1035
        %v1114 = vunpack.c.l.b16 %v1036
        %v1115 = vunpack.c.h.b16 %v1036
        %v1116 = vunpack.c.l.b16 %v1037
        %v1117 = vunpack.c.h.b16 %v1037
        %v1118 = vunpack.c.l.b16 %v1038
        %v1119 = vunpack.c.h.b16 %v1038
        %v1120 = vunpack.c.l.b16 %v1039
        %v1121 = vunpack.c.h.b16 %v1039
        %v1122 = vunpack.c.l.b16 %v1040
        %v1123 = vunpack.c.h.b16 %v1040
        %v1124 = vunpack.c.l.b16 %v1041
        %v1125 = vunpack.c.h.b16 %v1041
        %v1126 = vunpack.c.l.b16 %v1042
        %v1127 = vunpack.c.h.b16 %v1042
        %v1128 = vunpack.c.l.b16 %v1043
        %v1129 = vunpack.c.h.b16 %v1043
        %v1130 = vunpack.c.l.b16 %v1044
        %v1131 = vunpack.c.h.b16 %v1044
        %v1132 = vunpack.c.l.b16 %v1045
        %v1133 = vunpack.c.h.b16 %v1045
        %v1134 = vunpack.c.l.b16 %v1046
        %v1135 = vunpack.c.h.b16 %v1046
        %v1136 = vunpack.c.l.b16 %v1047
        %v1137 = vunpack.c.h.b16 %v1047
        %v1138 = vunpack.c.l.b16 %v1048
        %v1139 = vunpack.c.h.b16 %v1048
        %v1140 = vunpack.c.l.b16 %v1049
        %v1141 = vunpack.c.h.b16 %v1049
        %v1142 = vunpack.c.l.b16 %v1050
        %v1143 = vunpack.c.h.b16 %v1050
        %v1144 = vunpack.c.l.b16 %v1051
        %v1145 = vunpack.c.h.b16 %v1051
        %v1146 = vunpack.c.l.b16 %v1052
        %v1147 = vunpack.c.h.b16 %v1052
        %v1148 = vunpack.c.l.b16 %v1053
        %v1149 = vunpack.c.h.b16 %v1053
        %v1150 = vunpack.c.l.b16 %v1054
        %v1151 = vunpack.c.h.b16 %v1054
        %v1152 = vunpack.c.l.b16 %v1055
        %v1153 = vunpack.c.h.b16 %v1055
        %v1154 = vunpack.c.l.b16 %v1056
        %v1155 = vunpack.c.h.b16 %v1056
        %v1156 = vunpack.c.l.b16 %v1057
        %v1157 = vunpack.c.h.b16 %v1057
        %v1158 = vunpack.c.l.b16 %v1058
        %v1159 = vunpack.c.h.b16 %v1058
        %v1160 = vunpack.c.l.b16 %v1059
        %v1161 = vunpack.c.h.b16 %v1059
        %v1162 = vunpack.c.l.b16 %v1060
        %v1163 = vunpack.c.h.b16 %v1060
        %v1164 = vunpack.c.l.b16 %v1061
        %v1165 = vunpack.c.h.b16 %v1061
        %v1166 = vpack.c.b16 %v1104, %v1102
        %v1167 = vpack.c.b16 %v1105, %v1103
        %v1168 = vpack.c.b16 %v1108, %v1106
        %v1169 = vpack.c.b16 %v1109, %v1107
        %v1170 = vpack.c.b16 %v1112, %v1110
        %v1171 = vpack.c.b16 %v1113, %v1111
        %v1172 = vpack.c.b16 %v1116, %v1114
        %v1173 = vpack.c.b16 %v1117, %v1115
        %v1174 = vpack.c.b16 %v1120, %v1118
        %v1175 = vpack.c.b16 %v1121, %v1119
        %v1176 = vpack.c.b16 %v1124, %v1122
        %v1177 = vpack.c.b16 %v1125, %v1123
        %v1178 = vpack.c.b16 %v1128, %v1126
        %v1179 = vpack.c.b16 %v1129, %v1127
        %v1180 = vpack.c.b16 %v1132, %v1130
        %v1181 = vpack.c.b16 %v1133, %v1131
        %v1182 = vpack.c.b16 %v1136, %v1134
        %v1183 = vpack.c.b16 %v1137, %v1135
        %v1184 = vpack.c.b16 %v1140, %v1138
        %v1185 = vpack.c.b16 %v1141, %v1139
        %v1186 = vpack.c.b16 %v1144, %v1142
        %v1187 = vpack.c.b16 %v1145, %v1143
        %v1188 = vpack.c.b16 %v1148, %v1146
        %v1189 = vpack.c.b16 %v1149, %v1147
        %v1190 = vpack.c.b16 %v1152, %v1150
        %v1191 = vpack.c.b16 %v1153, %v1151
        %v1192 = vpack.c.b16 %v1156, %v1154
        %v1193 = vpack.c.b16 %v1157, %v1155
        %v1194 = vpack.c.b16 %v1160, %v1158
        %v1195 = vpack.c.b16 %v1161, %v1159
        %v1196 = vpack.c.b16 %v1164, %v1162
        %v1197 = vpack.c.b16 %v1165, %v1163
        %1230 = vmatprep.subr.bf16.mxu0 %v1167
        %1231 = vmatpush1.bf16.msra.mxu0 %v1166
        %1232 = vmatprep.subr.bf16.mxu0 %v1169
        %1233 = vmatpush1.bf16.msra.mxu0 %v1168
        %1234 = vmatprep.subr.bf16.mxu0 %v1171
        %1235 = vmatpush1.bf16.msra.mxu0 %v1170
        %1236 = vmatprep.subr.bf16.mxu0 %v1173
        %1237 = vmatpush1.bf16.msra.mxu0 %v1172
        %1238 = vmatprep.subr.bf16.mxu0 %v1175
        %1239 = vmatpush1.bf16.msra.mxu0 %v1174
        %1240 = vmatprep.subr.bf16.mxu0 %v1177
        %1241 = vmatpush1.bf16.msra.mxu0 %v1176
        %1242 = vmatprep.subr.bf16.mxu0 %v1179
        %1243 = vmatpush1.bf16.msra.mxu0 %v1178
        %1244 = vmatprep.subr.bf16.mxu0 %v1181
        %1245 = vmatpush1.bf16.msra.mxu0 %v1180
        %1246 = vmatprep.subr.bf16.mxu0 %v1183
        %1247 = vmatpush1.bf16.msra.mxu0 %v1182
        %1248 = vmatprep.subr.bf16.mxu0 %v1185
        %1249 = vmatpush1.bf16.msra.mxu0 %v1184
        %1250 = vmatprep.subr.bf16.mxu0 %v1187
        %1251 = vmatpush1.bf16.msra.mxu0 %v1186
        %1252 = vmatprep.subr.bf16.mxu0 %v1189
        %1253 = vmatpush1.bf16.msra.mxu0 %v1188
        %1254 = vmatprep.subr.bf16.mxu0 %v1191
        %1255 = vmatpush1.bf16.msra.mxu0 %v1190
        %1256 = vmatprep.subr.bf16.mxu0 %v1193
        %1257 = vmatpush1.bf16.msra.mxu0 %v1192
        %1258 = vmatprep.subr.bf16.mxu0 %v1195
        %1259 = vmatpush1.bf16.msra.mxu0 %v1194
        %1260 = vmatprep.subr.bf16.mxu0 %v1197
        %1261 = vmatpush1.bf16.msra.mxu0 %v1196
        %1262 = vmatprep.mubr.bf16.mxu0 %v824
        %1263 = vmatmul.mubr.bf16.gmra.mrb[0].mxu0 %v823
        %v1264 = vpop.f32.mrb[0].mxu0
        %v1265 = vadd.f32 %v1065, %v1264
        %v1266 = vpop.f32.mrb[0].mxu0
        %v1267 = vadd.f32 %v1069, %v1266
        %v1268 = vpop.f32.mrb[0].mxu0
        %v1269 = vadd.f32 %v1065, %v1268
        %v1270 = vpop.f32.mrb[0].mxu0
        %v1271 = vadd.f32 %v1069, %v1270
        %1272 = vdwg.mxu0
        %v1273 = vld [vmem:[#allocation7] sm:$0xff]
        %v1274 = vld [vmem:[#allocation7 + $0x8] sm:$0xff]
        %v1275 = vld [vmem:[#allocation7 + $0x10] sm:$0xff]
        %v1276 = vld [vmem:[#allocation7 + $0x18] sm:$0xff]
        %v1277 = vld [vmem:[#allocation7 + $0x20] sm:$0xff]
        %v1278 = vld [vmem:[#allocation7 + $0x28] sm:$0xff]
        %v1279 = vld [vmem:[#allocation7 + $0x30] sm:$0xff]
        %v1280 = vld [vmem:[#allocation7 + $0x38] sm:$0xff]
        %v1281 = vld [vmem:[#allocation7 + $0x40] sm:$0xff]
        %v1282 = vld [vmem:[#allocation7 + $0x48] sm:$0xff]
        %v1283 = vld [vmem:[#allocation7 + $0x50] sm:$0xff]
        %v1284 = vld [vmem:[#allocation7 + $0x58] sm:$0xff]
        %v1285 = vld [vmem:[#allocation7 + $0x60] sm:$0xff]
        %v1286 = vld [vmem:[#allocation7 + $0x68] sm:$0xff]
        %v1287 = vld [vmem:[#allocation7 + $0x70] sm:$0xff]
        %v1288 = vld [vmem:[#allocation7 + $0x78] sm:$0xff]
        %v1289 = vld [vmem:[#allocation7 + $0x80] sm:$0xff]
        %v1290 = vld [vmem:[#allocation7 + $0x88] sm:$0xff]
        %v1291 = vld [vmem:[#allocation7 + $0x90] sm:$0xff]
        %v1292 = vld [vmem:[#allocation7 + $0x98] sm:$0xff]
        %v1293 = vld [vmem:[#allocation7 + $0xa0] sm:$0xff]
        %v1294 = vld [vmem:[#allocation7 + $0xa8] sm:$0xff]
        %v1295 = vld [vmem:[#allocation7 + $0xb0] sm:$0xff]
        %v1296 = vld [vmem:[#allocation7 + $0xb8] sm:$0xff]
        %v1297 = vld [vmem:[#allocation7 + $0xc0] sm:$0xff]
        %v1298 = vld [vmem:[#allocation7 + $0xc8] sm:$0xff]
        %v1299 = vld [vmem:[#allocation7 + $0xd0] sm:$0xff]
        %v1300 = vld [vmem:[#allocation7 + $0xd8] sm:$0xff]
        %v1301 = vld [vmem:[#allocation7 + $0xe0] sm:$0xff]
        %v1302 = vld [vmem:[#allocation7 + $0xe8] sm:$0xff]
        %v1303 = vld [vmem:[#allocation7 + $0xf0] sm:$0xff]
        %v1304 = vld [vmem:[#allocation7 + $0xf8] sm:$0xff]
        %v1305 = vlaneseq
        %v1306 = vshrl.u32 %v1305, 7
        %v1307 = vsub.s32 4, %v1306
        %v1308 = vrot.slane %v682, %v1307
        %v1309 = vlaneseq
        %v1310 = vshrl.u32 %v1309, 7
        %v1311 = vsub.s32 4, %v1310
        %v1312 = vrot.slane %v683, %v1311
        %v1315 = vunpack.c.l.b16 %v689
        %v1316 = vunpack.c.h.b16 %v689
        %v1317 = vunpack.c.l.b16 %v690
        %v1318 = vunpack.c.h.b16 %v690
        %v1319 = vpack.c.b16 %v1317, %v1315
        %v1320 = vpack.c.b16 %v1318, %v1316
        %v1355 = vunpack.c.l.b16 %v1273
        %v1356 = vunpack.c.h.b16 %v1273
        %v1357 = vunpack.c.l.b16 %v1274
        %v1358 = vunpack.c.h.b16 %v1274
        %v1359 = vunpack.c.l.b16 %v1275
        %v1360 = vunpack.c.h.b16 %v1275
        %v1361 = vunpack.c.l.b16 %v1276
        %v1362 = vunpack.c.h.b16 %v1276
        %v1363 = vunpack.c.l.b16 %v1277
        %v1364 = vunpack.c.h.b16 %v1277
        %v1365 = vunpack.c.l.b16 %v1278
        %v1366 = vunpack.c.h.b16 %v1278
        %v1367 = vunpack.c.l.b16 %v1279
        %v1368 = vunpack.c.h.b16 %v1279
        %v1369 = vunpack.c.l.b16 %v1280
        %v1370 = vunpack.c.h.b16 %v1280
        %v1371 = vunpack.c.l.b16 %v1281
        %v1372 = vunpack.c.h.b16 %v1281
        %v1373 = vunpack.c.l.b16 %v1282
        %v1374 = vunpack.c.h.b16 %v1282
        %v1375 = vunpack.c.l.b16 %v1283
        %v1376 = vunpack.c.h.b16 %v1283
        %v1377 = vunpack.c.l.b16 %v1284
        %v1378 = vunpack.c.h.b16 %v1284
        %v1379 = vunpack.c.l.b16 %v1285
        %v1380 = vunpack.c.h.b16 %v1285
        %v1381 = vunpack.c.l.b16 %v1286
        %v1382 = vunpack.c.h.b16 %v1286
        %v1383 = vunpack.c.l.b16 %v1287
        %v1384 = vunpack.c.h.b16 %v1287
        %v1385 = vunpack.c.l.b16 %v1288
        %v1386 = vunpack.c.h.b16 %v1288
        %v1387 = vunpack.c.l.b16 %v1289
        %v1388 = vunpack.c.h.b16 %v1289
        %v1389 = vunpack.c.l.b16 %v1290
        %v1390 = vunpack.c.h.b16 %v1290
        %v1391 = vunpack.c.l.b16 %v1291
        %v1392 = vunpack.c.h.b16 %v1291
        %v1393 = vunpack.c.l.b16 %v1292
        %v1394 = vunpack.c.h.b16 %v1292
        %v1395 = vunpack.c.l.b16 %v1293
        %v1396 = vunpack.c.h.b16 %v1293
        %v1397 = vunpack.c.l.b16 %v1294
        %v1398 = vunpack.c.h.b16 %v1294
        %v1399 = vunpack.c.l.b16 %v1295
        %v1400 = vunpack.c.h.b16 %v1295
        %v1401 = vunpack.c.l.b16 %v1296
        %v1402 = vunpack.c.h.b16 %v1296
        %v1403 = vunpack.c.l.b16 %v1297
        %v1404 = vunpack.c.h.b16 %v1297
        %v1405 = vunpack.c.l.b16 %v1298
        %v1406 = vunpack.c.h.b16 %v1298
        %v1407 = vunpack.c.l.b16 %v1299
        %v1408 = vunpack.c.h.b16 %v1299
        %v1409 = vunpack.c.l.b16 %v1300
        %v1410 = vunpack.c.h.b16 %v1300
        %v1411 = vunpack.c.l.b16 %v1301
        %v1412 = vunpack.c.h.b16 %v1301
        %v1413 = vunpack.c.l.b16 %v1302
        %v1414 = vunpack.c.h.b16 %v1302
        %v1415 = vunpack.c.l.b16 %v1303
        %v1416 = vunpack.c.h.b16 %v1303
        %v1417 = vunpack.c.l.b16 %v1304
        %v1418 = vunpack.c.h.b16 %v1304
        %v1419 = vpack.c.b16 %v1357, %v1355
        %v1420 = vpack.c.b16 %v1358, %v1356
        %v1421 = vpack.c.b16 %v1361, %v1359
        %v1422 = vpack.c.b16 %v1362, %v1360
        %v1423 = vpack.c.b16 %v1365, %v1363
        %v1424 = vpack.c.b16 %v1366, %v1364
        %v1425 = vpack.c.b16 %v1369, %v1367
        %v1426 = vpack.c.b16 %v1370, %v1368
        %v1427 = vpack.c.b16 %v1373, %v1371
        %v1428 = vpack.c.b16 %v1374, %v1372
        %v1429 = vpack.c.b16 %v1377, %v1375
        %v1430 = vpack.c.b16 %v1378, %v1376
        %v1431 = vpack.c.b16 %v1381, %v1379
        %v1432 = vpack.c.b16 %v1382, %v1380
        %v1433 = vpack.c.b16 %v1385, %v1383
        %v1434 = vpack.c.b16 %v1386, %v1384
        %v1435 = vpack.c.b16 %v1389, %v1387
        %v1436 = vpack.c.b16 %v1390, %v1388
        %v1437 = vpack.c.b16 %v1393, %v1391
        %v1438 = vpack.c.b16 %v1394, %v1392
        %v1439 = vpack.c.b16 %v1397, %v1395
        %v1440 = vpack.c.b16 %v1398, %v1396
        %v1441 = vpack.c.b16 %v1401, %v1399
        %v1442 = vpack.c.b16 %v1402, %v1400
        %v1443 = vpack.c.b16 %v1405, %v1403
        %v1444 = vpack.c.b16 %v1406, %v1404
        %v1445 = vpack.c.b16 %v1409, %v1407
        %v1446 = vpack.c.b16 %v1410, %v1408
        %v1447 = vpack.c.b16 %v1413, %v1411
        %v1448 = vpack.c.b16 %v1414, %v1412
        %v1449 = vpack.c.b16 %v1417, %v1415
        %v1450 = vpack.c.b16 %v1418, %v1416
        %1483 = vmatprep.subr.bf16.mxu0 %v1420
        %1484 = vmatpush1.bf16.msra.mxu0 %v1419
        %1485 = vmatprep.subr.bf16.mxu0 %v1422
        %1486 = vmatpush1.bf16.msra.mxu0 %v1421
        %1487 = vmatprep.subr.bf16.mxu0 %v1424
        %1488 = vmatpush1.bf16.msra.mxu0 %v1423
        %1489 = vmatprep.subr.bf16.mxu0 %v1426
        %1490 = vmatpush1.bf16.msra.mxu0 %v1425
        %1491 = vmatprep.subr.bf16.mxu0 %v1428
        %1492 = vmatpush1.bf16.msra.mxu0 %v1427
        %1493 = vmatprep.subr.bf16.mxu0 %v1430
        %1494 = vmatpush1.bf16.msra.mxu0 %v1429
        %1495 = vmatprep.subr.bf16.mxu0 %v1432
        %1496 = vmatpush1.bf16.msra.mxu0 %v1431
        %1497 = vmatprep.subr.bf16.mxu0 %v1434
        %1498 = vmatpush1.bf16.msra.mxu0 %v1433
        %1499 = vmatprep.subr.bf16.mxu0 %v1436
        %1500 = vmatpush1.bf16.msra.mxu0 %v1435
        %1501 = vmatprep.subr.bf16.mxu0 %v1438
        %1502 = vmatpush1.bf16.msra.mxu0 %v1437
        %1503 = vmatprep.subr.bf16.mxu0 %v1440
        %1504 = vmatpush1.bf16.msra.mxu0 %v1439
        %1505 = vmatprep.subr.bf16.mxu0 %v1442
        %1506 = vmatpush1.bf16.msra.mxu0 %v1441
        %1507 = vmatprep.subr.bf16.mxu0 %v1444
        %1508 = vmatpush1.bf16.msra.mxu0 %v1443
        %1509 = vmatprep.subr.bf16.mxu0 %v1446
        %1510 = vmatpush1.bf16.msra.mxu0 %v1445
        %1511 = vmatprep.subr.bf16.mxu0 %v1448
        %1512 = vmatpush1.bf16.msra.mxu0 %v1447
        %1513 = vmatprep.subr.bf16.mxu0 %v1450
        %1514 = vmatpush1.bf16.msra.mxu0 %v1449
        %1515 = vmatprep.mubr.bf16.mxu0 %v1320
        %1516 = vmatmul.mubr.bf16.gmra.mrb[0].mxu0 %v1319
        %v1517 = vpop.f32.mrb[0].mxu0
        %v1518 = vadd.f32 %v1308, %v1517
        %v1519 = vpop.f32.mrb[0].mxu0
        %v1520 = vadd.f32 %v1312, %v1519
        %v1521 = vpop.f32.mrb[0].mxu0
        %v1522 = vadd.f32 %v1308, %v1521
        %v1523 = vpop.f32.mrb[0].mxu0
        %v1524 = vadd.f32 %v1312, %v1523
        %1525 = vdwg.mxu0
        %v1526 = vmul.f32 %v1022, %v769
        %v1527 = vmul.f32 %v1024, %v771
        %v1528 = vmul.f32 %v1026, %v773
        %v1529 = vmul.f32 %v1028, %v775
        %v1530 = vlaneseq
        %v1531 = vshrl.u32 %v1530, 7
        %v1532 = vsub.s32 1, %v1531
        %v1533 = vrot.slane %v682, %v1532
        %v1534 = vlaneseq
        %v1535 = vshrl.u32 %v1534, 7
        %v1536 = vsub.s32 1, %v1535
        %v1537 = vrot.slane %v683, %v1536
        %v1538 = vadd.f32 %v769, %v1533
        %v1539 = vadd.f32 %v771, %v1537
        %v1540 = vadd.f32 %v773, %v1533
        %v1541 = vadd.f32 %v775, %v1537
        %v1542 = vmul.f32 %v1518, %v1538
        %v1543 = vmul.f32 %v1520, %v1539
        %v1544 = vmul.f32 %v1522, %v1540
        %v1545 = vmul.f32 %v1524, %v1541
        %v1546 = vadd.f32 %v1526, %v1542
        %v1547 = vadd.f32 %v1527, %v1543
        %v1548 = vadd.f32 %v1528, %v1544
        %v1549 = vadd.f32 %v1529, %v1545
        %v1550 = vpack.c.bf16 %v1548, %v1546
        %v1551 = vpack.c.bf16 %v1549, %v1547
        %v1552 = vld [vmem:[#allocation8] sm:$0xff]
        %v1553 = vld [vmem:[#allocation8 + $0x8] sm:$0xff]
        %v1554 = vld [vmem:[#allocation8 + $0x10] sm:$0xff]
        %v1555 = vld [vmem:[#allocation8 + $0x18] sm:$0xff]
        %v1556 = vld [vmem:[#allocation8 + $0x20] sm:$0xff]
        %v1557 = vld [vmem:[#allocation8 + $0x28] sm:$0xff]
        %v1558 = vld [vmem:[#allocation8 + $0x30] sm:$0xff]
        %v1559 = vld [vmem:[#allocation8 + $0x38] sm:$0xff]
        %v1560 = vld [vmem:[#allocation8 + $0x40] sm:$0xff]
        %v1561 = vld [vmem:[#allocation8 + $0x48] sm:$0xff]
        %v1562 = vld [vmem:[#allocation8 + $0x50] sm:$0xff]
        %v1563 = vld [vmem:[#allocation8 + $0x58] sm:$0xff]
        %v1564 = vld [vmem:[#allocation8 + $0x60] sm:$0xff]
        %v1565 = vld [vmem:[#allocation8 + $0x68] sm:$0xff]
        %v1566 = vld [vmem:[#allocation8 + $0x70] sm:$0xff]
        %v1567 = vld [vmem:[#allocation8 + $0x78] sm:$0xff]
        %v1568 = vld [vmem:[#allocation8 + $0x80] sm:$0xff]
        %v1569 = vld [vmem:[#allocation8 + $0x88] sm:$0xff]
        %v1570 = vld [vmem:[#allocation8 + $0x90] sm:$0xff]
        %v1571 = vld [vmem:[#allocation8 + $0x98] sm:$0xff]
        %v1572 = vld [vmem:[#allocation8 + $0xa0] sm:$0xff]
        %v1573 = vld [vmem:[#allocation8 + $0xa8] sm:$0xff]
        %v1574 = vld [vmem:[#allocation8 + $0xb0] sm:$0xff]
        %v1575 = vld [vmem:[#allocation8 + $0xb8] sm:$0xff]
        %v1576 = vld [vmem:[#allocation8 + $0xc0] sm:$0xff]
        %v1577 = vld [vmem:[#allocation8 + $0xc8] sm:$0xff]
        %v1578 = vld [vmem:[#allocation8 + $0xd0] sm:$0xff]
        %v1579 = vld [vmem:[#allocation8 + $0xd8] sm:$0xff]
        %v1580 = vld [vmem:[#allocation8 + $0xe0] sm:$0xff]
        %v1581 = vld [vmem:[#allocation8 + $0xe8] sm:$0xff]
        %v1582 = vld [vmem:[#allocation8 + $0xf0] sm:$0xff]
        %v1583 = vld [vmem:[#allocation8 + $0xf8] sm:$0xff]
        %v1584 = vld [vmem:[%s9] sm:$0xff]
        %v1587 = vunpack.c.l.b16 %v691
        %v1588 = vunpack.c.l.b16 %v692
        %v1589 = vpack.c.b16 %v1588, %v1587
        %v1591 = vunpack.c.l.b16 %v1584
        %v1592 = vunpack.c.h.b16 %v1584
        %v1593 = vpack.c.b16 %v1591, %v1591
        %v1594 = vpack.c.b16 %v1592, %v1592
        %vm1595 = vcmask 64512
        %v1597 = vsel %vm1595, %v1589, 0
        %vm1599 = vcmask 1043456
        %v1601 = vsel %vm1599, %v1593, 0
        %v1604 = vsel %vm1599, %v1594, 0
        %1606 = vmatprep.subr.bf16.mxu0 %v1604
        %1607 = vmatpush1.bf16.msra.mxu0 %v1601
        %1608 = vmatprep.subr.bf16.mxu0 0
        %1609 = vmatpush1.bf16.msra.mxu0 0
        %1610 = vmatprep.subr.bf16.mxu0 0
        %1611 = vmatpush1.bf16.msra.mxu0 0
        %1612 = vmatprep.subr.bf16.mxu0 0
        %1613 = vmatpush1.bf16.msra.mxu0 0
        %1614 = vmatprep.subr.bf16.mxu0 0
        %1615 = vmatpush1.bf16.msra.mxu0 0
        %1616 = vmatprep.subr.bf16.mxu0 0
        %1617 = vmatpush1.bf16.msra.mxu0 0
        %1618 = vmatprep.subr.bf16.mxu0 0
        %1619 = vmatpush1.bf16.msra.mxu0 0
        %1620 = vmatprep.subr.bf16.mxu0 0
        %1621 = vmatpush1.bf16.msra.mxu0 0
        %1622 = vmatprep.subr.bf16.mxu0 0
        %1623 = vmatpush1.bf16.msra.mxu0 0
        %1624 = vmatprep.subr.bf16.mxu0 0
        %1625 = vmatpush1.bf16.msra.mxu0 0
        %1626 = vmatprep.subr.bf16.mxu0 0
        %1627 = vmatpush1.bf16.msra.mxu0 0
        %1628 = vmatprep.subr.bf16.mxu0 0
        %1629 = vmatpush1.bf16.msra.mxu0 0
        %1630 = vmatprep.subr.bf16.mxu0 0
        %1631 = vmatpush1.bf16.msra.mxu0 0
        %1632 = vmatprep.subr.bf16.mxu0 0
        %1633 = vmatpush1.bf16.msra.mxu0 0
        %1634 = vmatprep.subr.bf16.mxu0 0
        %1635 = vmatpush1.bf16.msra.mxu0 0
        %1636 = vmatprep.subr.bf16.mxu0 0
        %1637 = vmatpush1.bf16.msra.mxu0 0
        %1638 = vmatprep.mubr.bf16.mxu0 0
        %1639 = vmatmul.mubr.bf16.gmra.mrb[0].mxu0 %v1597
        %v1640 = vpop.f32.mrb[0].mxu0
        %v1641 = vadd.f32 0.0, %v1640
        %v1642 = vpop.f32.mrb[0].mxu0
        %v1643 = vadd.f32 0.0, %v1642
        %v1644 = vpop.f32.mrb[0].mxu0
        %v1645 = vadd.f32 0.0, %v1644
        %v1646 = vpop.f32.mrb[0].mxu0
        %v1647 = vadd.f32 0.0, %v1646
        %1648 = vdwg.mxu0
        %v1681 = vunpack.c.l.b16 %v1552
        %v1682 = vunpack.c.h.b16 %v1552
        %v1683 = vunpack.c.l.b16 %v1553
        %v1684 = vunpack.c.h.b16 %v1553
        %v1685 = vunpack.c.l.b16 %v1554
        %v1686 = vunpack.c.h.b16 %v1554
        %v1687 = vunpack.c.l.b16 %v1555
        %v1688 = vunpack.c.h.b16 %v1555
        %v1689 = vunpack.c.l.b16 %v1556
        %v1690 = vunpack.c.h.b16 %v1556
        %v1691 = vunpack.c.l.b16 %v1557
        %v1692 = vunpack.c.h.b16 %v1557
        %v1693 = vunpack.c.l.b16 %v1558
        %v1694 = vunpack.c.h.b16 %v1558
        %v1695 = vunpack.c.l.b16 %v1559
        %v1696 = vunpack.c.h.b16 %v1559
        %v1697 = vunpack.c.l.b16 %v1560
        %v1698 = vunpack.c.h.b16 %v1560
        %v1699 = vunpack.c.l.b16 %v1561
        %v1700 = vunpack.c.h.b16 %v1561
        %v1701 = vunpack.c.l.b16 %v1562
        %v1702 = vunpack.c.h.b16 %v1562
        %v1703 = vunpack.c.l.b16 %v1563
        %v1704 = vunpack.c.h.b16 %v1563
        %v1705 = vunpack.c.l.b16 %v1564
        %v1706 = vunpack.c.h.b16 %v1564
        %v1707 = vunpack.c.l.b16 %v1565
        %v1708 = vunpack.c.h.b16 %v1565
        %v1709 = vunpack.c.l.b16 %v1566
        %v1710 = vunpack.c.h.b16 %v1566
        %v1711 = vunpack.c.l.b16 %v1567
        %v1712 = vunpack.c.h.b16 %v1567
        %v1713 = vunpack.c.l.b16 %v1568
        %v1714 = vunpack.c.h.b16 %v1568
        %v1715 = vunpack.c.l.b16 %v1569
        %v1716 = vunpack.c.h.b16 %v1569
        %v1717 = vunpack.c.l.b16 %v1570
        %v1718 = vunpack.c.h.b16 %v1570
        %v1719 = vunpack.c.l.b16 %v1571
        %v1720 = vunpack.c.h.b16 %v1571
        %v1721 = vunpack.c.l.b16 %v1572
        %v1722 = vunpack.c.h.b16 %v1572
        %v1723 = vunpack.c.l.b16 %v1573
        %v1724 = vunpack.c.h.b16 %v1573
        %v1725 = vunpack.c.l.b16 %v1574
        %v1726 = vunpack.c.h.b16 %v1574
        %v1727 = vunpack.c.l.b16 %v1575
        %v1728 = vunpack.c.h.b16 %v1575
        %v1729 = vunpack.c.l.b16 %v1576
        %v1730 = vunpack.c.h.b16 %v1576
        %v1731 = vunpack.c.l.b16 %v1577
        %v1732 = vunpack.c.h.b16 %v1577
        %v1733 = vunpack.c.l.b16 %v1578
        %v1734 = vunpack.c.h.b16 %v1578
        %v1735 = vunpack.c.l.b16 %v1579
        %v1736 = vunpack.c.h.b16 %v1579
        %v1737 = vunpack.c.l.b16 %v1580
        %v1738 = vunpack.c.h.b16 %v1580
        %v1739 = vunpack.c.l.b16 %v1581
        %v1740 = vunpack.c.h.b16 %v1581
        %v1741 = vunpack.c.l.b16 %v1582
        %v1742 = vunpack.c.h.b16 %v1582
        %v1743 = vunpack.c.l.b16 %v1583
        %v1744 = vunpack.c.h.b16 %v1583
        %v1745 = vpack.c.b16 %v1683, %v1681
        %v1746 = vpack.c.b16 %v1684, %v1682
        %v1747 = vpack.c.b16 %v1687, %v1685
        %v1748 = vpack.c.b16 %v1688, %v1686
        %v1749 = vpack.c.b16 %v1691, %v1689
        %v1750 = vpack.c.b16 %v1692, %v1690
        %v1751 = vpack.c.b16 %v1695, %v1693
        %v1752 = vpack.c.b16 %v1696, %v1694
        %v1753 = vpack.c.b16 %v1699, %v1697
        %v1754 = vpack.c.b16 %v1700, %v1698
        %v1755 = vpack.c.b16 %v1703, %v1701
        %v1756 = vpack.c.b16 %v1704, %v1702
        %v1757 = vpack.c.b16 %v1707, %v1705
        %v1758 = vpack.c.b16 %v1708, %v1706
        %v1759 = vpack.c.b16 %v1711, %v1709
        %v1760 = vpack.c.b16 %v1712, %v1710
        %v1761 = vpack.c.b16 %v1715, %v1713
        %v1762 = vpack.c.b16 %v1716, %v1714
        %v1763 = vpack.c.b16 %v1719, %v1717
        %v1764 = vpack.c.b16 %v1720, %v1718
        %v1765 = vpack.c.b16 %v1723, %v1721
        %v1766 = vpack.c.b16 %v1724, %v1722
        %v1767 = vpack.c.b16 %v1727, %v1725
        %v1768 = vpack.c.b16 %v1728, %v1726
        %v1769 = vpack.c.b16 %v1731, %v1729
        %v1770 = vpack.c.b16 %v1732, %v1730
        %v1771 = vpack.c.b16 %v1735, %v1733
        %v1772 = vpack.c.b16 %v1736, %v1734
        %v1773 = vpack.c.b16 %v1739, %v1737
        %v1774 = vpack.c.b16 %v1740, %v1738
        %v1775 = vpack.c.b16 %v1743, %v1741
        %v1776 = vpack.c.b16 %v1744, %v1742
        %1809 = vmatprep.subr.bf16.mxu0 %v1746
        %1810 = vmatpush1.bf16.msra.mxu0 %v1745
        %1811 = vmatprep.subr.bf16.mxu0 %v1748
        %1812 = vmatpush1.bf16.msra.mxu0 %v1747
        %1813 = vmatprep.subr.bf16.mxu0 %v1750
        %1814 = vmatpush1.bf16.msra.mxu0 %v1749
        %1815 = vmatprep.subr.bf16.mxu0 %v1752
        %1816 = vmatpush1.bf16.msra.mxu0 %v1751
        %1817 = vmatprep.subr.bf16.mxu0 %v1754
        %1818 = vmatpush1.bf16.msra.mxu0 %v1753
        %1819 = vmatprep.subr.bf16.mxu0 %v1756
        %1820 = vmatpush1.bf16.msra.mxu0 %v1755
        %1821 = vmatprep.subr.bf16.mxu0 %v1758
        %1822 = vmatpush1.bf16.msra.mxu0 %v1757
        %1823 = vmatprep.subr.bf16.mxu0 %v1760
        %1824 = vmatpush1.bf16.msra.mxu0 %v1759
        %1825 = vmatprep.subr.bf16.mxu0 %v1762
        %1826 = vmatpush1.bf16.msra.mxu0 %v1761
        %1827 = vmatprep.subr.bf16.mxu0 %v1764
        %1828 = vmatpush1.bf16.msra.mxu0 %v1763
        %1829 = vmatprep.subr.bf16.mxu0 %v1766
        %1830 = vmatpush1.bf16.msra.mxu0 %v1765
        %1831 = vmatprep.subr.bf16.mxu0 %v1768
        %1832 = vmatpush1.bf16.msra.mxu0 %v1767
        %1833 = vmatprep.subr.bf16.mxu0 %v1770
        %1834 = vmatpush1.bf16.msra.mxu0 %v1769
        %1835 = vmatprep.subr.bf16.mxu0 %v1772
        %1836 = vmatpush1.bf16.msra.mxu0 %v1771
        %1837 = vmatprep.subr.bf16.mxu0 %v1774
        %1838 = vmatpush1.bf16.msra.mxu0 %v1773
        %1839 = vmatprep.subr.bf16.mxu0 %v1776
        %1840 = vmatpush1.bf16.msra.mxu0 %v1775
        %1841 = vmatprep.mubr.bf16.mxu0 %v1551
        %1842 = vmatmul.mubr.bf16.gmra.mrb[0].mxu0 %v1550
        %v1843 = vpop.f32.mrb[0].mxu0
        %v1844 = vadd.f32 %v1641, %v1843
        %v1845 = vpop.f32.mrb[0].mxu0
        %v1846 = vadd.f32 %v1643, %v1845
        %v1847 = vpop.f32.mrb[0].mxu0
        %v1848 = vadd.f32 %v1645, %v1847
        %v1849 = vpop.f32.mrb[0].mxu0
        %v1850 = vadd.f32 %v1647, %v1849
        %1851 = vdwg.mxu0
        %1852 = vrot.lane.b32.xlu0 %v1844, 32
        %v1853 = vpop.permute.xlu0 %1852
        %1854 = vrot.lane.b32.xlu0 %v1848, 32
        %v1855 = vpop.permute.xlu0 %1854
        %1856 = vrot.lane.b32.xlu0 %v1846, 32
        %v1857 = vpop.permute.xlu0 %1856
        %1858 = vrot.lane.b32.xlu0 %v1850, 32
        %v1859 = vpop.permute.xlu0 %1858
        %v1860 = vlaneseq
        %v1861 = vand.u32 %v1860, 127
        %vm1862 = vcmp.lt.s32.totalorder %v1861, 32
        %v1863 = vsel %vm1862, %v1853, %v1857
        %v1864 = vsel %vm1862, %v1855, %v1859
        %v1865 = vsel %vm1862, %v1857, %v1853
        %v1866 = vsel %vm1862, %v1859, %v1855
        %v1867 = vmax.f32 %v1844, %v1865
        %v1868 = vmax.f32 %v1846, %v1863
        %v1869 = vmax.f32 %v1848, %v1866
        %v1870 = vmax.f32 %v1850, %v1864
        %1871 = vrot.lane.b32.xlu0 %v1867, 64
        %v1872 = vpop.permute.xlu0 %1871
        %1873 = vrot.lane.b32.xlu0 %v1869, 64
        %v1874 = vpop.permute.xlu0 %1873
        %1875 = vrot.lane.b32.xlu0 %v1868, 64
        %v1876 = vpop.permute.xlu0 %1875
        %1877 = vrot.lane.b32.xlu0 %v1870, 64
        %v1878 = vpop.permute.xlu0 %1877
        %vm1879 = vcmp.lt.s32.totalorder %v1861, 64
        %v1880 = vsel %vm1879, %v1872, %v1876
        %v1881 = vsel %vm1879, %v1874, %v1878
        %v1882 = vsel %vm1879, %v1876, %v1872
        %v1883 = vsel %vm1879, %v1878, %v1874
        %v1884 = vmax.f32 %v1867, %v1882
        %v1885 = vmax.f32 %v1868, %v1880
        %v1886 = vmax.f32 %v1869, %v1883
        %v1887 = vmax.f32 %v1870, %v1881
        %v1888 = vmax.f32 %v1884, %v1885
        %v1889 = vmax.f32 %v1886, %v1887
        %v1890 = vsub.f32 %v1844, %v1888
        %v1891 = vsub.f32 %v1846, %v1888
        %v1892 = vsub.f32 %v1848, %v1889
        %v1893 = vsub.f32 %v1850, %v1889
        %v1894 = vmul.f32 %v1890, 1.442695
        %v1895 = vpow.pop %v1894
        %v1896 = vmul.f32 %v1891, 1.442695
        %v1897 = vpow.pop %v1896
        %v1898 = vmul.f32 %v1892, 1.442695
        %v1899 = vpow.pop %v1898
        %v1900 = vmul.f32 %v1893, 1.442695
        %v1901 = vpow.pop %v1900
        %v1902 = vmul.f32 %v1895, %v1265
        %v1903 = vmul.f32 %v1897, %v1267
        %v1904 = vmul.f32 %v1899, %v1269
        %v1905 = vmul.f32 %v1901, %v1271
        %v1906 = vpack.c.bf16 %v1904, %v1902
        %v1907 = vpack.c.bf16 %v1905, %v1903
        %v1908 = vld [vmem:[%s10] sm:$0xf]
        %v1909 = vld [vmem:[%s10 + $0x4] sm:$0xf]
        %v1910 = vld [vmem:[%s10 + $0x8] sm:$0xf]
        %v1911 = vld [vmem:[%s10 + $0xc] sm:$0xf]
        %v1912 = vld [vmem:[%s10 + $0x10] sm:$0xf]
        %v1913 = vld [vmem:[%s10 + $0x14] sm:$0xf]
        %v1914 = vld [vmem:[%s10 + $0x18] sm:$0xf]
        %v1915 = vld [vmem:[%s10 + $0x1c] sm:$0xf]
        %v1916 = vld [vmem:[%s10 + $0x20] sm:$0xf]
        %v1917 = vld [vmem:[%s10 + $0x24] sm:$0xf]
        %v1918 = vld [vmem:[%s10 + $0x28] sm:$0xf]
        %v1919 = vld [vmem:[%s10 + $0x2c] sm:$0xf]
        %v1920 = vld [vmem:[%s10 + $0x30] sm:$0xf]
        %v1921 = vld [vmem:[%s10 + $0x34] sm:$0xf]
        %v1922 = vld [vmem:[%s10 + $0x38] sm:$0xf]
        %v1923 = vld [vmem:[%s10 + $0x3c] sm:$0xf]
        %v1924 = vld [vmem:[%s10 + $0x40] sm:$0xf]
        %v1925 = vld [vmem:[%s10 + $0x44] sm:$0xf]
        %v1926 = vld [vmem:[%s10 + $0x48] sm:$0xf]
        %v1927 = vld [vmem:[%s10 + $0x4c] sm:$0xf]
        %v1928 = vld [vmem:[%s10 + $0x50] sm:$0xf]
        %v1929 = vld [vmem:[%s10 + $0x54] sm:$0xf]
        %v1930 = vld [vmem:[%s10 + $0x58] sm:$0xf]
        %v1931 = vld [vmem:[%s10 + $0x5c] sm:$0xf]
        %v1932 = vld [vmem:[%s10 + $0x60] sm:$0xf]
        %v1933 = vld [vmem:[%s10 + $0x64] sm:$0xf]
        %v1934 = vld [vmem:[%s10 + $0x68] sm:$0xf]
        %v1935 = vld [vmem:[%s10 + $0x6c] sm:$0xf]
        %v1936 = vld [vmem:[%s10 + $0x70] sm:$0xf]
        %v1937 = vld [vmem:[%s10 + $0x74] sm:$0xf]
        %v1938 = vld [vmem:[%s10 + $0x78] sm:$0xf]
        %v1939 = vld [vmem:[%s10 + $0x7c] sm:$0xf]
        %v1972 = vunpack.c.l.b16 %v1908
        %v1973 = vunpack.c.l.b16 %v1909
        %v1974 = vunpack.c.l.b16 %v1910
        %v1975 = vunpack.c.l.b16 %v1911
        %v1976 = vunpack.c.l.b16 %v1912
        %v1977 = vunpack.c.l.b16 %v1913
        %v1978 = vunpack.c.l.b16 %v1914
        %v1979 = vunpack.c.l.b16 %v1915
        %v1980 = vunpack.c.l.b16 %v1916
        %v1981 = vunpack.c.l.b16 %v1917
        %v1982 = vunpack.c.l.b16 %v1918
        %v1983 = vunpack.c.l.b16 %v1919
        %v1984 = vunpack.c.l.b16 %v1920
        %v1985 = vunpack.c.l.b16 %v1921
        %v1986 = vunpack.c.l.b16 %v1922
        %v1987 = vunpack.c.l.b16 %v1923
        %v1988 = vunpack.c.l.b16 %v1924
        %v1989 = vunpack.c.l.b16 %v1925
        %v1990 = vunpack.c.l.b16 %v1926
        %v1991 = vunpack.c.l.b16 %v1927
        %v1992 = vunpack.c.l.b16 %v1928
        %v1993 = vunpack.c.l.b16 %v1929
        %v1994 = vunpack.c.l.b16 %v1930
        %v1995 = vunpack.c.l.b16 %v1931
        %v1996 = vunpack.c.l.b16 %v1932
        %v1997 = vunpack.c.l.b16 %v1933
        %v1998 = vunpack.c.l.b16 %v1934
        %v1999 = vunpack.c.l.b16 %v1935
        %v2000 = vunpack.c.l.b16 %v1936
        %v2001 = vunpack.c.l.b16 %v1937
        %v2002 = vunpack.c.l.b16 %v1938
        %v2003 = vunpack.c.l.b16 %v1939
        %v2004 = vpack.c.b16 %v1973, %v1972
        %v2005 = vpack.c.b16 %v1975, %v1974
        %v2006 = vpack.c.b16 %v1977, %v1976
        %v2007 = vpack.c.b16 %v1979, %v1978
        %v2008 = vpack.c.b16 %v1981, %v1980
        %v2009 = vpack.c.b16 %v1983, %v1982
        %v2010 = vpack.c.b16 %v1985, %v1984
        %v2011 = vpack.c.b16 %v1987, %v1986
        %v2012 = vpack.c.b16 %v1989, %v1988
        %v2013 = vpack.c.b16 %v1991, %v1990
        %v2014 = vpack.c.b16 %v1993, %v1992
        %v2015 = vpack.c.b16 %v1995, %v1994
        %v2016 = vpack.c.b16 %v1997, %v1996
        %v2017 = vpack.c.b16 %v1999, %v1998
        %v2018 = vpack.c.b16 %v2001, %v2000
        %v2019 = vpack.c.b16 %v2003, %v2002
        %2036 = vmatprep.subr.bf16.mxu0 0
        %2037 = vmatpush1.bf16.msra.mxu0 %v2004
        %2038 = vmatprep.subr.bf16.mxu0 0
        %2039 = vmatpush1.bf16.msra.mxu0 %v2005
        %2040 = vmatprep.subr.bf16.mxu0 0
        %2041 = vmatpush1.bf16.msra.mxu0 %v2006
        %2042 = vmatprep.subr.bf16.mxu0 0
        %2043 = vmatpush1.bf16.msra.mxu0 %v2007
        %2044 = vmatprep.subr.bf16.mxu0 0
        %2045 = vmatpush1.bf16.msra.mxu0 %v2008
        %2046 = vmatprep.subr.bf16.mxu0 0
        %2047 = vmatpush1.bf16.msra.mxu0 %v2009
        %2048 = vmatprep.subr.bf16.mxu0 0
        %2049 = vmatpush1.bf16.msra.mxu0 %v2010
        %2050 = vmatprep.subr.bf16.mxu0 0
        %2051 = vmatpush1.bf16.msra.mxu0 %v2011
        %2052 = vmatprep.subr.bf16.mxu0 0
        %2053 = vmatpush1.bf16.msra.mxu0 %v2012
        %2054 = vmatprep.subr.bf16.mxu0 0
        %2055 = vmatpush1.bf16.msra.mxu0 %v2013
        %2056 = vmatprep.subr.bf16.mxu0 0
        %2057 = vmatpush1.bf16.msra.mxu0 %v2014
        %2058 = vmatprep.subr.bf16.mxu0 0
        %2059 = vmatpush1.bf16.msra.mxu0 %v2015
        %2060 = vmatprep.subr.bf16.mxu0 0
        %2061 = vmatpush1.bf16.msra.mxu0 %v2016
        %2062 = vmatprep.subr.bf16.mxu0 0
        %2063 = vmatpush1.bf16.msra.mxu0 %v2017
        %2064 = vmatprep.subr.bf16.mxu0 0
        %2065 = vmatpush1.bf16.msra.mxu0 %v2018
        %2066 = vmatprep.subr.bf16.mxu0 0
        %2067 = vmatpush1.bf16.msra.mxu0 %v2019
        %2068 = vmatprep.mubr.bf16.mxu0 %v1907
        %2069 = vmatmul.mubr.bf16.gmra.mrb[0].mxu0 %v1906
        %v2070 = vpop.f32.mrb[0].mxu0
        %v2071 = vadd.f32 0.0, %v2070
        %v2072 = vpop.f32.mrb[0].mxu0
        %v2073 = vpop.f32.mrb[0].mxu0
        %v2074 = vadd.f32 0.0, %v2073
        %v2075 = vpop.f32.mrb[0].mxu0
        %2076 = vdwg.mxu0
        %v2077 = vpack.c.bf16 %v1899, %v1895
        %v2078 = vpack.c.bf16 %v1901, %v1897
        %2079 = vmatprep.subr.bf16.mxu0 0
        %2080 = vmatpush1.bf16.msra.mxu0 %v2004
        %2081 = vmatprep.subr.bf16.mxu0 0
        %2082 = vmatpush1.bf16.msra.mxu0 %v2005
        %2083 = vmatprep.subr.bf16.mxu0 0
        %2084 = vmatpush1.bf16.msra.mxu0 %v2006
        %2085 = vmatprep.subr.bf16.mxu0 0
        %2086 = vmatpush1.bf16.msra.mxu0 %v2007
        %2087 = vmatprep.subr.bf16.mxu0 0
        %2088 = vmatpush1.bf16.msra.mxu0 %v2008
        %2089 = vmatprep.subr.bf16.mxu0 0
        %2090 = vmatpush1.bf16.msra.mxu0 %v2009
        %2091 = vmatprep.subr.bf16.mxu0 0
        %2092 = vmatpush1.bf16.msra.mxu0 %v2010
        %2093 = vmatprep.subr.bf16.mxu0 0
        %2094 = vmatpush1.bf16.msra.mxu0 %v2011
        %2095 = vmatprep.subr.bf16.mxu0 0
        %2096 = vmatpush1.bf16.msra.mxu0 %v2012
        %2097 = vmatprep.subr.bf16.mxu0 0
        %2098 = vmatpush1.bf16.msra.mxu0 %v2013
        %2099 = vmatprep.subr.bf16.mxu0 0
        %2100 = vmatpush1.bf16.msra.mxu0 %v2014
        %2101 = vmatprep.subr.bf16.mxu0 0
        %2102 = vmatpush1.bf16.msra.mxu0 %v2015
        %2103 = vmatprep.subr.bf16.mxu0 0
        %2104 = vmatpush1.bf16.msra.mxu0 %v2016
        %2105 = vmatprep.subr.bf16.mxu0 0
        %2106 = vmatpush1.bf16.msra.mxu0 %v2017
        %2107 = vmatprep.subr.bf16.mxu0 0
        %2108 = vmatpush1.bf16.msra.mxu0 %v2018
        %2109 = vmatprep.subr.bf16.mxu0 0
        %2110 = vmatpush1.bf16.msra.mxu0 %v2019
        %2111 = vmatprep.mubr.bf16.mxu0 %v2078
        %2112 = vmatmul.mubr.bf16.gmra.mrb[0].mxu0 %v2077
        %v2113 = vpop.f32.mrb[0].mxu0
        %v2114 = vadd.f32 0.0, %v2113
        %v2115 = vpop.f32.mrb[0].mxu0
        %v2116 = vpop.f32.mrb[0].mxu0
        %v2117 = vadd.f32 0.0, %v2116
        %v2118 = vpop.f32.mrb[0].mxu0
        %2119 = vdwg.mxu0
        %v2120 = vrcp.pop %v2114
        %v2121 = vrcp.pop %v2117
        %v2122 = vmul.f32 %v2071, %v2120
        %v2123 = vmul.f32 %v2074, %v2121
        %v2124 = vpack.c.bf16 %v2123, %v2122
        %v2125 = vld [vmem:[%s11] sm:$0xf]
        %v2126 = vld [vmem:[%s11 + $0x4] sm:$0xf]
        %v2127 = vld [vmem:[%s11 + $0x8] sm:$0xf]
        %v2128 = vld [vmem:[%s11 + $0xc] sm:$0xf]
        %v2129 = vlaneseq
        %v2130 = vshrl.u32 %v2129, 7
        %v2131 = vsub.s32 0, %v2130
        %v2132 = vrot.slane %v684, %v2131
        %v2137 = vunpack.c.l.b16 %v2125
        %v2138 = vunpack.c.l.b16 %v2126
        %v2139 = vunpack.c.l.b16 %v2127
        %v2140 = vunpack.c.l.b16 %v2128
        %v2141 = vpack.c.b16 %v2138, %v2137
        %v2142 = vpack.c.b16 %v2140, %v2139
        %v2146 = vsel %vm730, %v2124, 0
        %2148 = vmatprep.subr.bf16.mxu0 0
        %2149 = vmatpush1.bf16.msra.mxu0 %v2141
        %2150 = vmatprep.subr.bf16.mxu0 0
        %2151 = vmatpush1.bf16.msra.mxu0 %v2142
        %2152 = vmatprep.subr.bf16.mxu0 0
        %2153 = vmatpush1.bf16.msra.mxu0 0
        %2154 = vmatprep.subr.bf16.mxu0 0
        %2155 = vmatpush1.bf16.msra.mxu0 0
        %2156 = vmatprep.subr.bf16.mxu0 0
        %2157 = vmatpush1.bf16.msra.mxu0 0
        %2158 = vmatprep.subr.bf16.mxu0 0
        %2159 = vmatpush1.bf16.msra.mxu0 0
        %2160 = vmatprep.subr.bf16.mxu0 0
        %2161 = vmatpush1.bf16.msra.mxu0 0
        %2162 = vmatprep.subr.bf16.mxu0 0
        %2163 = vmatpush1.bf16.msra.mxu0 0
        %2164 = vmatprep.subr.bf16.mxu0 0
        %2165 = vmatpush1.bf16.msra.mxu0 0
        %2166 = vmatprep.subr.bf16.mxu0 0
        %2167 = vmatpush1.bf16.msra.mxu0 0
        %2168 = vmatprep.subr.bf16.mxu0 0
        %2169 = vmatpush1.bf16.msra.mxu0 0
        %2170 = vmatprep.subr.bf16.mxu0 0
        %2171 = vmatpush1.bf16.msra.mxu0 0
        %2172 = vmatprep.subr.bf16.mxu0 0
        %2173 = vmatpush1.bf16.msra.mxu0 0
        %2174 = vmatprep.subr.bf16.mxu0 0
        %2175 = vmatpush1.bf16.msra.mxu0 0
        %2176 = vmatprep.subr.bf16.mxu0 0
        %2177 = vmatpush1.bf16.msra.mxu0 0
        %2178 = vmatprep.subr.bf16.mxu0 0
        %2179 = vmatpush1.bf16.msra.mxu0 0
        %2180 = vmatprep.mubr.bf16.mxu0 0
        %2181 = vmatmul.mubr.bf16.gmra.mrb[0].mxu0 %v2146
        %v2182 = vpop.f32.mrb[0].mxu0
        %v2183 = vadd.f32 %v2132, %v2182
        %v2184 = vpop.f32.mrb[0].mxu0
        %v2185 = vpop.f32.mrb[0].mxu0
        %v2186 = vadd.f32 %v2132, %v2185
        %v2187 = vpop.f32.mrb[0].mxu0
        %2188 = vdwg.mxu0
        %v2189 = vunpack.c.l.bf16 %v691
        %v2190 = vunpack.c.l.bf16 %v692
        %v2191 = vsel %vm1595, %v2189, -inf
        %2192 = vmax.xlane.f32.xlu0 %v2191
        %v2193 = vpop.xlane.xlu0 %2192
        %v2194 = vsel %vm1595, %v2190, -inf
        %2195 = vmax.xlane.f32.xlu0 %v2194
        %v2196 = vpop.xlane.xlu0 %2195
        %vm2197 = vcmp.lt.f32.partialorder %v2193, -5e+08
        %vm2198 = vcmp.lt.f32.partialorder %v2196, -5e+08
        %v2199 = vsel %vm2197, 1, 0
        %v2200 = vsel %vm2198, 1, 0
        %vm2201 = vcmp.eq.s32.totalorder %v2199, 1
        %vm2202 = vcmp.eq.s32.totalorder %v2200, 1
        %v2203 = vsel %vm2201, 0.0, %v2183
        %v2204 = vsel %vm2202, 0.0, %v2186
        %v2205 = vld [vmem:[%s12] sm:$0xf]
        %v2206 = vld [vmem:[%s12 + $0x4] sm:$0xf]
        %v2207 = vld [vmem:[%s12 + $0x8] sm:$0xf]
        %v2208 = vld [vmem:[%s12 + $0xc] sm:$0xf]
        %v2213 = vunpack.c.l.b16 %v2205
        %v2214 = vunpack.c.l.b16 %v2206
        %v2215 = vunpack.c.l.b16 %v2207
        %v2216 = vunpack.c.l.b16 %v2208
        %v2217 = vpack.c.b16 %v2214, %v2213
        %v2218 = vpack.c.b16 %v2216, %v2215
        %2221 = vmatprep.subr.bf16.mxu0 0
        %2222 = vmatpush1.bf16.msra.mxu0 %v2217
        %2223 = vmatprep.subr.bf16.mxu0 0
        %2224 = vmatpush1.bf16.msra.mxu0 %v2218
        %2225 = vmatprep.subr.bf16.mxu0 0
        %2226 = vmatpush1.bf16.msra.mxu0 0
        %2227 = vmatprep.subr.bf16.mxu0 0
        %2228 = vmatpush1.bf16.msra.mxu0 0
        %2229 = vmatprep.subr.bf16.mxu0 0
        %2230 = vmatpush1.bf16.msra.mxu0 0
        %2231 = vmatprep.subr.bf16.mxu0 0
        %2232 = vmatpush1.bf16.msra.mxu0 0
        %2233 = vmatprep.subr.bf16.mxu0 0
        %2234 = vmatpush1.bf16.msra.mxu0 0
        %2235 = vmatprep.subr.bf16.mxu0 0
        %2236 = vmatpush1.bf16.msra.mxu0 0
        %2237 = vmatprep.subr.bf16.mxu0 0
        %2238 = vmatpush1.bf16.msra.mxu0 0
        %2239 = vmatprep.subr.bf16.mxu0 0
        %2240 = vmatpush1.bf16.msra.mxu0 0
        %2241 = vmatprep.subr.bf16.mxu0 0
        %2242 = vmatpush1.bf16.msra.mxu0 0
        %2243 = vmatprep.subr.bf16.mxu0 0
        %2244 = vmatpush1.bf16.msra.mxu0 0
        %2245 = vmatprep.subr.bf16.mxu0 0
        %2246 = vmatpush1.bf16.msra.mxu0 0
        %2247 = vmatprep.subr.bf16.mxu0 0
        %2248 = vmatpush1.bf16.msra.mxu0 0
        %2249 = vmatprep.subr.bf16.mxu0 0
        %2250 = vmatpush1.bf16.msra.mxu0 0
        %2251 = vmatprep.subr.bf16.mxu0 0
        %2252 = vmatpush1.bf16.msra.mxu0 0
        %2253 = vmatprep.mubr.bf16.mxu0 0
        %2254 = vmatmul.mubr.bf16.gmra.mrb[0].mxu0 %v732
        %v2255 = vpop.f32.mrb[0].mxu0
        %v2256 = vadd.f32 0.0, %v2255
        %v2257 = vpop.f32.mrb[0].mxu0
        %v2258 = vpop.f32.mrb[0].mxu0
        %v2259 = vadd.f32 0.0, %v2258
        %v2260 = vpop.f32.mrb[0].mxu0
        %2261 = vdwg.mxu0
        %v2262 = vadd.f32 %v2203, %v2256
        %v2263 = vadd.f32 %v2204, %v2259
        %v2264 = vlaneseq
        %v2265 = vshrl.u32 %v2264, 7
        %v2266 = vsub.s32 1, %v2265
        %v2267 = vrot.slane %v684, %v2266
        %v2268 = vadd.f32 %v2262, %v2267
        %v2269 = vadd.f32 %v2263, %v2267
        %v2270 = vmax.f32 %v2268, 0.0
        %v2271 = vmax.f32 %v2269, 0.0
        %v2272 = vpack.c.bf16 %v2271, %v2270
        %v2273 = vld [vmem:[%s13] sm:$0xf]
        %v2274 = vld [vmem:[%s13 + $0x4] sm:$0xf]
        %v2275 = vld [vmem:[%s13 + $0x8] sm:$0xf]
        %v2276 = vld [vmem:[%s13 + $0xc] sm:$0xf]
        %v2277 = vld [vmem:[%s16] sm:$0x1]
        %v2279 = vlaneseq
        %v2280 = vshrl.u32 %v2279, 7
        %v2281 = vsub.s32 0, %v2280
        %v2282 = vrot.slane %v2277, %v2281
        %v2288 = vunpack.c.l.b16 %v2273
        %v2289 = vunpack.c.l.b16 %v2274
        %v2290 = vunpack.c.l.b16 %v2275
        %v2291 = vunpack.c.l.b16 %v2276
        %v2292 = vpack.c.b16 %v2289, %v2288
        %v2293 = vpack.c.b16 %v2291, %v2290
        %v2297 = vsel %vm730, %v2272, 0
        %2299 = vmatprep.subr.bf16.mxu0 0
        %2300 = vmatpush1.bf16.msra.mxu0 %v2292
        %2301 = vmatprep.subr.bf16.mxu0 0
        %2302 = vmatpush1.bf16.msra.mxu0 %v2293
        %2303 = vmatprep.subr.bf16.mxu0 0
        %2304 = vmatpush1.bf16.msra.mxu0 0
        %2305 = vmatprep.subr.bf16.mxu0 0
        %2306 = vmatpush1.bf16.msra.mxu0 0
        %2307 = vmatprep.subr.bf16.mxu0 0
        %2308 = vmatpush1.bf16.msra.mxu0 0
        %2309 = vmatprep.subr.bf16.mxu0 0
        %2310 = vmatpush1.bf16.msra.mxu0 0
        %2311 = vmatprep.subr.bf16.mxu0 0
        %2312 = vmatpush1.bf16.msra.mxu0 0
        %2313 = vmatprep.subr.bf16.mxu0 0
        %2314 = vmatpush1.bf16.msra.mxu0 0
        %2315 = vmatprep.subr.bf16.mxu0 0
        %2316 = vmatpush1.bf16.msra.mxu0 0
        %2317 = vmatprep.subr.bf16.mxu0 0
        %2318 = vmatpush1.bf16.msra.mxu0 0
        %2319 = vmatprep.subr.bf16.mxu0 0
        %2320 = vmatpush1.bf16.msra.mxu0 0
        %2321 = vmatprep.subr.bf16.mxu0 0
        %2322 = vmatpush1.bf16.msra.mxu0 0
        %2323 = vmatprep.subr.bf16.mxu0 0
        %2324 = vmatpush1.bf16.msra.mxu0 0
        %2325 = vmatprep.subr.bf16.mxu0 0
        %2326 = vmatpush1.bf16.msra.mxu0 0
        %2327 = vmatprep.subr.bf16.mxu0 0
        %2328 = vmatpush1.bf16.msra.mxu0 0
        %2329 = vmatprep.subr.bf16.mxu0 0
        %2330 = vmatpush1.bf16.msra.mxu0 0
        %2331 = vmatprep.mubr.bf16.mxu0 0
        %2332 = vmatmul.mubr.bf16.gmra.mrb[0].mxu0 %v2297
        %v2333 = vpop.f32.mrb[0].mxu0
        %v2334 = vadd.f32 %v2282, %v2333
        %v2335 = vpop.f32.mrb[0].mxu0
        %v2336 = vpop.f32.mrb[0].mxu0
        %v2337 = vadd.f32 %v2282, %v2336
        %v2338 = vpop.f32.mrb[0].mxu0
        %2339 = vdwg.mxu0
        %2340 = vst.msk [vmem:[%s653] sm:$0xff] %vm730, %v2334
        %2341 = vst.msk [vmem:[%s653 + $0x8] sm:$0xff] %vm730, %v2337
        %s2342 = sand.u32 %s419, 1
        %s2343 = scalar_lea.sflag [#allocation4], %s2342
        %s2344 = sand.u32 %s419, 1
        %s2345 = smul.addr %s2344, 16
        %s2346 = scalar_lea.vmem [#allocation10], %s2345
        // Predicated region
        $region105: #{tpu_custom_call.1} parent=87 // pred_check
          %p2347 = pneg %p429
        $region106: #{tpu_custom_call.1} parent=87 // pred_check_branch
          %2349 = sbr.rel (%p2347) target = $region108
        $region107: #{tpu_custom_call.1} parent=87 // pred_region
          %s2350 = smul.u32 2, %s34
          %s2352 = ssub.s32 256, 256
          %2353 = vsyncadd %s2343, %s2352
          %s2354 = smul.addr %s2350, 128
          %s2355 = scalar_lea.hbm %s17, %s2354
          %s2356 = sshll.u32 %s2346, 4
          %s2357 = int_to_ptr.vmem [resolvable:$true] %s2356
          %2362 = dma.vmem_to_hbm [thread:$0]  %s2357, 256, %s2355, %s2343, 128, 128, 8
        $region108: #{tpu_custom_call.1} parent=87 // pred_fallthru
          _
      $region88: #{tpu_custom_call.1} parent=5 // pred_fallthru
        _
      %p2363 = scmp.le.s32.totalorder 2, %s29
      // Predicated region
      $region109: #{tpu_custom_call.1} parent=5 // pred_check
        %p2364 = pneg %p2363
      $region110: #{tpu_custom_call.1} parent=5 // pred_check_branch
        %2366 = sbr.rel (%p2364) target = $region112
      $region111: #{tpu_custom_call.1} parent=5 // pred_region
        %s2367 = ssub.s32 %s29, 2
        // Predicated region
        $region113: #{tpu_custom_call.1} parent=111 // pred_check
          %p2368 = pneg %p435
        $region114: #{tpu_custom_call.1} parent=111 // pred_check_branch
          %2370 = sbr.rel (%p2368) target = $region116
        $region115: #{tpu_custom_call.1} parent=111 // pred_region
          %s2371 = sand.u32 %s420, 1
          %s2372 = scalar_lea.sflag [#allocation4], %s2371
          %s2373 = sand.u32 %s420, 1
          %s2374 = smul.addr %s2373, 16
          %s2375 = scalar_lea.vmem [#allocation10], %s2374
          %2376 = dma.done %s2372, 256
        $region116: #{tpu_custom_call.1} parent=111 // pred_fallthru
          _
      $region112: #{tpu_custom_call.1} parent=5 // pred_fallthru
        _
    $region6: #{tpu_custom_call.1} parent=1 // loop_footer
      %s33 = sadd.s32 1, %s29
    $region7: #{tpu_custom_call.1} parent=1 // loop_footer_branch
      %28 = sbr.rel target = $region3
    $region8: #{tpu_custom_call.1} parent=1 // loop_exit
      _
    %2377 = vsyncpa [#allocation3], 1
    %s2378 = scalar_lea.sflag [#allocation3], 1
    %2379 = vsyncpa %s2378, 1
    %2380 = vsyncpa [#allocation6], 1
    %2381 = vsyncpa [#allocation9], 1
    %2382 = vsyncpa [#allocation4], 1
    %s2383 = scalar_lea.sflag [#allocation4], 1
    %2384 = vsyncpa %s2383, 1

</llo_original>
